<compile_context>
chip_gen: v7x
topology: tpu7x:2x2x1
jax: 0.10.0
libtpu: 0.0.40
codegen_flags: <defaults>
</compile_context>

<pallas_src>
import functools

import jax
import jax.numpy as jnp
from jax.experimental import pallas as pl
from jax.experimental.pallas import tpu as pltpu


def _mha_kernel(x_ref, w_qkv_ref, b_qkv_ref, wo_ref, bo_ref,
                out_ref, attn_ref, *, block_bs, seq_len, n_heads, d_k, d_v):
    B, L, H = block_bs, seq_len, n_heads
    Fq = H * d_k                           # width of the Q (and K) projection
    Fv = H * d_v                           # width of the V projection

    # --- Fused QKV projection: one wide MXU matmul, bf16 operands, f32 acc.
    # The 1/sqrt(head_dim) score scale is pre-folded into the Q columns.
    qkv = jnp.dot(x_ref[...], w_qkv_ref[...],
                  preferred_element_type=jnp.float32) + b_qkv_ref[0]
    qkv = qkv.reshape(B, L, 2 * Fq + Fv)                    # (B, L, 2Fq+Fv) f32

    # --- Head split: fold (head, batch) into one leading batch axis so every
    # attention stage below is a single batched contraction instead of H tiny
    # per-head ones.  The per-head lane slices are unavoidable relayout
    # plumbing; the compute stages themselves are fully batched.
    def gather_heads(base, d):
        parts = [qkv[:, :, base + h * d: base + (h + 1) * d] for h in range(H)]
        return jnp.concatenate(parts, axis=0).astype(jnp.bfloat16)   # (H*B, L, d)

    q = gather_heads(0, d_k)               # scale already folded into W_Q
    k = gather_heads(Fq, d_k)
    v = gather_heads(2 * Fq, d_v)

    # --- Scores + numerically stable softmax, batched over (head, batch).
    s = jnp.einsum('bqd,bkd->bqk', q, k,
                   preferred_element_type=jnp.float32)       # (H*B, L, L) f32
    m = jnp.max(s, axis=-1, keepdims=True)
    e = jnp.exp(s - m)
    denom = jnp.sum(e, axis=-1, keepdims=True)
    # Exact normalization: the weights are returned to the caller, so every
    # row must sum to 1 (no approx. reciprocal on caller-visible values).
    attn = e / denom                                         # (H*B, L, L) f32

    # --- Value-weighted output, batched over (head, batch).
    o = jnp.einsum('bqk,bkd->bqd', attn.astype(jnp.bfloat16), v,
                   preferred_element_type=jnp.float32)       # (H*B, L, d_v)

    # --- Single, lane-dense store of the attention weights: pack heads along
    # the last (lane) axis -> (B, L, H*L).  The wrapper un-packs to
    # (bs, n_heads, L, L).  One wide store per step instead of H strided,
    # masked 8-lane stores.
    attn_ref[...] = jnp.concatenate(
        [attn[h * B:(h + 1) * B] for h in range(H)], axis=-1
    ).astype(attn_ref.dtype)

    # --- Concatenate head outputs along lanes so the output projection stays
    # a single wide-K MXU matmul.
    concat = jnp.concatenate([o[h * B:(h + 1) * B] for h in range(H)], axis=-1)
    concat = concat.reshape(B * L, Fv).astype(jnp.bfloat16)  # (B*L, H*d_v)

    final = jnp.dot(concat, wo_ref[...],
                    preferred_element_type=jnp.float32) + bo_ref[0]
    out_ref[...] = final.astype(out_ref.dtype)


def _vmem_limit_bytes():
    """~75% of physical VMEM, capped at 64 MiB (128 MiB on v5e/v6e, 64 MiB on v7x)."""
    try:
        cap = int(pltpu.get_tpu_info().vmem_capacity_bytes)
    except Exception:
        cap = 128 * 1024 * 1024
    return min(64 * 1024 * 1024, (3 * cap) // 4)


def _pick_block_bs(bs, seq_len, d_model, n_heads, d_k, d_v, fused,
                   vmem_budget_bytes):
    """Largest divisor of bs whose VMEM working set fits the budget.

    Counts the double-buffered I/O blocks, the (single-buffered) weights AND
    the in-kernel intermediates (qkv, bf16 q/k/v copies, softmax temporaries,
    head outputs).  Prefers grid lengths divisible by 2 so both v7x
    TensorCores stay busy under dimension_semantics=("parallel",).
    """
    L, H = seq_len, n_heads
    w_bytes = 2 * (d_model * fused + H * d_v * d_model) + 4 * (fused + d_model)

    def est(b):
        rows = b * L
        io = 2 * (rows * d_model * 2          # x block (bf16), double-buffered
                  + rows * d_model * 4        # out block (f32), double-buffered
                  + b * L * H * L * 4)        # attn block (f32), double-buffered
        tmp = (rows * fused * 4               # qkv intermediate (f32)
               + rows * fused * 2             # bf16 q/k/v copies
               + 3 * b * H * L * L * 4        # scores / exp / attn (f32)
               + b * H * L * d_v * 4          # head outputs (f32)
               + rows * H * d_v * 2)          # concatenated heads (bf16)
        return io + tmp + w_bytes

    divisors = [b for b in range(1, bs + 1) if bs % b == 0]
    fitting = [b for b in divisors if est(b) <= vmem_budget_bytes]
    if not fitting:
        return 1
    even_grid = [b for b in fitting if (bs // b) % 2 == 0]   # 2 TensorCores (v7x)
    if even_grid:
        return max(even_grid)
    multi_step = [b for b in fitting if bs // b >= 2]
    return max(multi_step) if multi_step else max(fitting)


def multihead_attention(Q, params, *, n_heads, d_k, d_v, block_bs=None):
    bs, L, d_model = Q.shape
    head_dim = d_model // n_heads          # module convention (== d_k here)
    scale = float(head_dim) ** (-0.5)

    wq, bq, wk, bk, wv, bv, wo, bo = params

    # Fuse the three projections; fold the score scale into the Q columns.
    # MXU operands become bf16 (halves HBM traffic & doubles MXU throughput);
    # biases stay f32 and are added to the f32 accumulators.
    w_qkv = jnp.concatenate([wq * scale, wk, wv], axis=1).astype(jnp.bfloat16)
    b_qkv = jnp.concatenate([bq * scale, bk, bv], axis=1)           # f32
    wo_b = wo.astype(jnp.bfloat16)
    fused = w_qkv.shape[1]

    vmem_limit = _vmem_limit_bytes()
    if block_bs is None:
        block_bs = _pick_block_bs(bs, L, d_model, n_heads, d_k, d_v, fused,
                                  vmem_budget_bytes=(3 * vmem_limit) // 5)
    assert bs % block_bs == 0
    grid = (bs // block_bs,)
    rows = block_bs * L

    # Flatten (batch, seq) -> rows in the wrapper (free XLA reshape) so the
    # kernel projections are tall, lane-dense matmuls.
    x2d = Q.reshape(bs * L, d_model).astype(jnp.bfloat16)

    kernel = functools.partial(_mha_kernel, block_bs=block_bs, seq_len=L,
                               n_heads=n_heads, d_k=d_k, d_v=d_v)

    flops = int(2 * bs * L * d_model * fused                        # fused QKV
                + 2 * bs * n_heads * L * L * (d_k + d_v)            # scores + attn@V
                + 2 * bs * L * (n_heads * d_v) * d_model)           # output projection
    bytes_accessed = int(2 * bs * L * d_model                       # x (bf16)
                         + 4 * bs * L * d_model                     # out (f32)
                         + 4 * bs * n_heads * L * L                 # attn (f32)
                         + 2 * (w_qkv.size + wo_b.size)             # weights (bf16)
                         + 4 * (b_qkv.size + bo.size))              # biases (f32)
    cost = pl.CostEstimate(flops=flops,
                           transcendentals=int(bs * n_heads * L * L),
                           bytes_accessed=bytes_accessed)

    # Weights/biases are grid-invariant -> single-buffer them to save VMEM.
    def wspec(shape):
        return pl.BlockSpec(shape, lambda b: (0, 0),
                            pipeline_mode=pl.Buffered(1))

    out2d, attn_packed = pl.pallas_call(
        kernel,
        out_shape=(
            jax.ShapeDtypeStruct((bs * L, d_model), jnp.float32),      # output (flat)
            jax.ShapeDtypeStruct((bs, L, n_heads * L), jnp.float32),   # packed attn
        ),
        grid_spec=pltpu.PrefetchScalarGridSpec(
            num_scalar_prefetch=0,
            grid=grid,
            in_specs=[
                pl.BlockSpec((rows, d_model), lambda b: (b, 0)),        # x (flattened)
                wspec((d_model, fused)),                                # fused W_QKV
                wspec((1, fused)),                                      # fused b_QKV
                wspec((n_heads * d_v, d_model)),                        # W_out
                wspec((1, d_model)),                                    # b_out
            ],
            out_specs=[
                pl.BlockSpec((rows, d_model), lambda b: (b, 0)),
                pl.BlockSpec((block_bs, L, n_heads * L), lambda b: (b, 0, 0)),
            ],
        ),
        compiler_params=pltpu.CompilerParams(
            dimension_semantics=("parallel",),
            vmem_limit_bytes=vmem_limit),
        cost_estimate=cost,
    )(x2d, w_qkv, b_qkv, wo_b, bo)

    out = out2d.reshape(bs, L, d_model)
    # Un-pack the lane-dense attention layout (bs, L, H*L) -> (bs, H, L, L);
    # this reshape/transpose is free XLA plumbing outside the kernel.
    attn = attn_packed.reshape(bs, L, n_heads, L).transpose(0, 2, 1, 3)
    return out, attn


def reference_mha(Q, params, *, n_heads, d_k, d_v):
    """Pure-JAX (f32) reference matching the PyTorch module semantics."""
    wq, bq, wk, bk, wv, bv, wo, bo = params
    bs, L, d_model = Q.shape
    head_dim = d_model // n_heads
    scale = head_dim ** (-0.5)

    q = (Q @ wq + bq[0]).reshape(bs, L, n_heads, d_k).transpose(0, 2, 1, 3)
    k = (Q @ wk + bk[0]).reshape(bs, L, n_heads, d_k).transpose(0, 2, 3, 1)
    v = (Q @ wv + bv[0]).reshape(bs, L, n_heads, d_v).transpose(0, 2, 1, 3)

    scores = jnp.einsum('bhqd,bhdk->bhqk', q, k) * scale
    attn = jax.nn.softmax(scores, axis=-1)
    out = jnp.einsum('bhqk,bhkd->bhqd', attn, v)
    out = out.transpose(0, 2, 1, 3).reshape(bs, L, n_heads * d_v)
    out = out @ wo + bo[0]
    return out, attn


if __name__ == "__main__":
    # Small, module-consistent shapes (bs a multiple of the batch block so the
    # grid has >= 2 steps and stays divisible by 2 TensorCores).
    bs, q_len, d_model, n_heads = 8, 8, 32, 4
    d_k = d_v = d_model // n_heads

    key = jax.random.PRNGKey(0)
    keys = jax.random.split(key, 9)

    Q = jax.random.normal(keys[0], (bs, q_len, d_model), dtype=jnp.float32)

    def init_w(k, shape):
        return 0.1 * jax.random.normal(k, shape, dtype=jnp.float32)

    params = (
        init_w(keys[1], (d_model, n_heads * d_k)),   # W_Q
        init_w(keys[2], (1, n_heads * d_k)),         # b_Q
        init_w(keys[3], (d_model, n_heads * d_k)),   # W_K
        init_w(keys[4], (1, n_heads * d_k)),         # b_K
        init_w(keys[5], (d_model, n_heads * d_v)),   # W_V
        init_w(keys[6], (1, n_heads * d_v)),         # b_V
        init_w(keys[7], (n_heads * d_v, d_model)),   # W_out
        init_w(keys[8], (1, d_model)),               # b_out
    )

    out, attn = multihead_attention(Q, params, n_heads=n_heads, d_k=d_k, d_v=d_v)
    out = jax.block_until_ready(out)
    attn = jax.block_until_ready(attn)

    out_ref, attn_ref = reference_mha(Q, params, n_heads=n_heads, d_k=d_k, d_v=d_v)
    assert out.shape == (bs, q_len, d_model)
    assert attn.shape == (bs, n_heads, q_len, q_len)
    # Kernel uses bf16 MXU operands with f32 accumulation; the reference is f32.
    assert jnp.allclose(out, out_ref, atol=2e-2, rtol=2e-2)
    assert jnp.allclose(attn, attn_ref, atol=2e-2, rtol=2e-2)
    # Exact softmax normalization: returned attention rows sum to 1.
    assert jnp.allclose(attn.sum(-1), 1.0, atol=1e-4)

    print("KERNEL_OK")
</pallas_src>

<mosaic_0001>
module attributes {stable_mosaic.version = 11 : i64} {
  func.func @_mha_kernel(%arg0: i32, %arg1: memref<32x32xbf16, #tpu.memory_space<vmem>>, %arg2: memref<32x96xbf16, #tpu.memory_space<vmem>>, %arg3: memref<1x96xf32, #tpu.memory_space<vmem>>, %arg4: memref<32x32xbf16, #tpu.memory_space<vmem>>, %arg5: memref<1x32xf32, #tpu.memory_space<vmem>>, %arg6: memref<32x32xf32, #tpu.memory_space<vmem>>, %arg7: memref<4x8x32xf32, #tpu.memory_space<vmem>>) attributes {dimension_semantics = [#tpu.dimension_semantics<parallel>], iteration_bounds = array<i64: 2>, scalar_prefetch = 0 : i64, scratch_operands = 0 : i64, tpu.core_type = #tpu.core_type<tc>, window_params = [{transform_indices = @transform_0, window_bounds = array<i64: 32, 32>}, {pipeline_mode = #tpu.pipeline_mode<synchronous>, transform_indices = @transform_1, window_bounds = array<i64: 32, 96>}, {pipeline_mode = #tpu.pipeline_mode<synchronous>, transform_indices = @transform_2, window_bounds = array<i64: 1, 96>}, {pipeline_mode = #tpu.pipeline_mode<synchronous>, transform_indices = @transform_3, window_bounds = array<i64: 32, 32>}, {pipeline_mode = #tpu.pipeline_mode<synchronous>, transform_indices = @transform_4, window_bounds = array<i64: 1, 32>}, {transform_indices = @transform_5, window_bounds = array<i64: 32, 32>}, {transform_indices = @transform_6, window_bounds = array<i64: 4, 8, 32>}]} {
    %c0 = arith.constant 0 : index
    %c0_0 = arith.constant 0 : index
    %0 = vector.load %arg1[%c0, %c0_0] : memref<32x32xbf16, #tpu.memory_space<vmem>>, vector<32x32xbf16>
    %c0_1 = arith.constant 0 : index
    %c0_2 = arith.constant 0 : index
    %1 = vector.load %arg2[%c0_1, %c0_2] : memref<32x96xbf16, #tpu.memory_space<vmem>>, vector<32x96xbf16>
    %cst = arith.constant dense<0.000000e+00> : vector<32x96xf32>
    %2 = tpu.matmul %0, %1, %cst {dimension_numbers = #tpu.dot_dimension_numbers<[1], [0], [0], [1], [0, 0, 1, 1], [], []>} : vector<32x32xbf16>, vector<32x96xbf16>, vector<32x96xf32> -> vector<32x96xf32>
    %c0_3 = arith.constant 0 : index
    %c0_4 = arith.constant 0 : index
    %3 = vector.load %arg3[%c0_3, %c0_4] : memref<1x96xf32, #tpu.memory_space<vmem>>, vector<1x96xf32>
    %4 = vector.shape_cast %3 : vector<1x96xf32> to vector<96xf32>
    %5 = vector.shape_cast %4 : vector<96xf32> to vector<1x96xf32>
    %6 = vector.broadcast %5 : vector<1x96xf32> to vector<32x96xf32>
    %7 = arith.addf %2, %6 : vector<32x96xf32>
    %8 = vector.shape_cast %7 : vector<32x96xf32> to vector<4x8x96xf32>
    %9 = vector.extract_strided_slice %8 {offsets = [0, 0, 0], sizes = [4, 8, 8], strides = [1, 1, 1]} : vector<4x8x96xf32> to vector<4x8x8xf32>
    %10 = vector.extract_strided_slice %8 {offsets = [0, 0, 8], sizes = [4, 8, 8], strides = [1, 1, 1]} : vector<4x8x96xf32> to vector<4x8x8xf32>
    %11 = vector.extract_strided_slice %8 {offsets = [0, 0, 16], sizes = [4, 8, 8], strides = [1, 1, 1]} : vector<4x8x96xf32> to vector<4x8x8xf32>
    %12 = vector.extract_strided_slice %8 {offsets = [0, 0, 24], sizes = [4, 8, 8], strides = [1, 1, 1]} : vector<4x8x96xf32> to vector<4x8x8xf32>
    %13 = tpu.concatenate %9, %10, %11, %12 in 0 : vector<4x8x8xf32>, vector<4x8x8xf32>, vector<4x8x8xf32>, vector<4x8x8xf32> -> vector<16x8x8xf32>
    %14 = arith.truncf %13 : vector<16x8x8xf32> to vector<16x8x8xbf16>
    %15 = vector.extract_strided_slice %8 {offsets = [0, 0, 32], sizes = [4, 8, 8], strides = [1, 1, 1]} : vector<4x8x96xf32> to vector<4x8x8xf32>
    %16 = vector.extract_strided_slice %8 {offsets = [0, 0, 40], sizes = [4, 8, 8], strides = [1, 1, 1]} : vector<4x8x96xf32> to vector<4x8x8xf32>
    %17 = vector.extract_strided_slice %8 {offsets = [0, 0, 48], sizes = [4, 8, 8], strides = [1, 1, 1]} : vector<4x8x96xf32> to vector<4x8x8xf32>
    %18 = vector.extract_strided_slice %8 {offsets = [0, 0, 56], sizes = [4, 8, 8], strides = [1, 1, 1]} : vector<4x8x96xf32> to vector<4x8x8xf32>
    %19 = tpu.concatenate %15, %16, %17, %18 in 0 : vector<4x8x8xf32>, vector<4x8x8xf32>, vector<4x8x8xf32>, vector<4x8x8xf32> -> vector<16x8x8xf32>
    %20 = arith.truncf %19 : vector<16x8x8xf32> to vector<16x8x8xbf16>
    %21 = vector.extract_strided_slice %8 {offsets = [0, 0, 64], sizes = [4, 8, 8], strides = [1, 1, 1]} : vector<4x8x96xf32> to vector<4x8x8xf32>
    %22 = vector.extract_strided_slice %8 {offsets = [0, 0, 72], sizes = [4, 8, 8], strides = [1, 1, 1]} : vector<4x8x96xf32> to vector<4x8x8xf32>
    %23 = vector.extract_strided_slice %8 {offsets = [0, 0, 80], sizes = [4, 8, 8], strides = [1, 1, 1]} : vector<4x8x96xf32> to vector<4x8x8xf32>
    %24 = vector.extract_strided_slice %8 {offsets = [0, 0, 88], sizes = [4, 8, 8], strides = [1, 1, 1]} : vector<4x8x96xf32> to vector<4x8x8xf32>
    %25 = tpu.concatenate %21, %22, %23, %24 in 0 : vector<4x8x8xf32>, vector<4x8x8xf32>, vector<4x8x8xf32>, vector<4x8x8xf32> -> vector<16x8x8xf32>
    %26 = arith.truncf %25 : vector<16x8x8xf32> to vector<16x8x8xbf16>
    "tpu.trace_start"() <{level = 10 : i32, message = "bqd,bkd->bqk"}> : () -> ()
    %cst_5 = arith.constant dense<0.000000e+00> : vector<16x8x8xf32>
    %27 = tpu.matmul %14, %20, %cst_5 {dimension_numbers = #tpu.dot_dimension_numbers<[2], [2], [1], [1], [0, 0, 0, 1, 1, 1], [0], [0]>} : vector<16x8x8xbf16>, vector<16x8x8xbf16>, vector<16x8x8xf32> -> vector<16x8x8xf32>
    "tpu.trace_stop"() : () -> ()
    %cst_6 = arith.constant dense<0xFF800000> : vector<16x8xf32>
    %28 = vector.multi_reduction <maximumf>, %27, %cst_6 [2] : vector<16x8x8xf32> to vector<16x8xf32>
    %29 = vector.shape_cast %28 : vector<16x8xf32> to vector<16x8x1xf32>
    %30 = vector.broadcast %29 : vector<16x8x1xf32> to vector<16x8x8xf32>
    %31 = arith.subf %27, %30 : vector<16x8x8xf32>
    %32 = math.exp %31 : vector<16x8x8xf32>
    %cst_7 = arith.constant dense<0.000000e+00> : vector<16x8xf32>
    %33 = vector.multi_reduction <add>, %32, %cst_7 [2] : vector<16x8x8xf32> to vector<16x8xf32>
    %34 = vector.shape_cast %33 : vector<16x8xf32> to vector<16x8x1xf32>
    %35 = vector.broadcast %34 : vector<16x8x1xf32> to vector<16x8x8xf32>
    %36 = arith.divf %32, %35 : vector<16x8x8xf32>
    %37 = arith.truncf %36 : vector<16x8x8xf32> to vector<16x8x8xbf16>
    "tpu.trace_start"() <{level = 10 : i32, message = "bqk,bkd->bqd"}> : () -> ()
    %cst_8 = arith.constant dense<0.000000e+00> : vector<16x8x8xf32>
    %38 = tpu.matmul %37, %26, %cst_8 {dimension_numbers = #tpu.dot_dimension_numbers<[2], [1], [1], [2], [0, 0, 0, 1, 1, 2], [0], [0]>} : vector<16x8x8xbf16>, vector<16x8x8xbf16>, vector<16x8x8xf32> -> vector<16x8x8xf32>
    "tpu.trace_stop"() : () -> ()
    %39 = vector.extract_strided_slice %36 {offsets = [0, 0, 0], sizes = [4, 8, 8], strides = [1, 1, 1]} : vector<16x8x8xf32> to vector<4x8x8xf32>
    %40 = vector.extract_strided_slice %36 {offsets = [4, 0, 0], sizes = [4, 8, 8], strides = [1, 1, 1]} : vector<16x8x8xf32> to vector<4x8x8xf32>
    %41 = vector.extract_strided_slice %36 {offsets = [8, 0, 0], sizes = [4, 8, 8], strides = [1, 1, 1]} : vector<16x8x8xf32> to vector<4x8x8xf32>
    %42 = vector.extract_strided_slice %36 {offsets = [12, 0, 0], sizes = [4, 8, 8], strides = [1, 1, 1]} : vector<16x8x8xf32> to vector<4x8x8xf32>
    %43 = tpu.concatenate %39, %40, %41, %42 in 2 : vector<4x8x8xf32>, vector<4x8x8xf32>, vector<4x8x8xf32>, vector<4x8x8xf32> -> vector<4x8x32xf32>
    %c0_9 = arith.constant 0 : index
    %c0_10 = arith.constant 0 : index
    %c0_11 = arith.constant 0 : index
    %44 = vector.load %arg7[%c0_9, %c0_10, %c0_11] : memref<4x8x32xf32, #tpu.memory_space<vmem>>, vector<4x8x32xf32>
    tpu.vector_store %arg7[%c0_9, %c0_10, %c0_11], %43 {strides = array<i32>} : memref<4x8x32xf32, #tpu.memory_space<vmem>>, vector<4x8x32xf32>,
    %45 = vector.extract_strided_slice %38 {offsets = [0, 0, 0], sizes = [4, 8, 8], strides = [1, 1, 1]} : vector<16x8x8xf32> to vector<4x8x8xf32>
    %46 = vector.extract_strided_slice %38 {offsets = [4, 0, 0], sizes = [4, 8, 8], strides = [1, 1, 1]} : vector<16x8x8xf32> to vector<4x8x8xf32>
    %47 = vector.extract_strided_slice %38 {offsets = [8, 0, 0], sizes = [4, 8, 8], strides = [1, 1, 1]} : vector<16x8x8xf32> to vector<4x8x8xf32>
    %48 = vector.extract_strided_slice %38 {offsets = [12, 0, 0], sizes = [4, 8, 8], strides = [1, 1, 1]} : vector<16x8x8xf32> to vector<4x8x8xf32>
    %49 = tpu.concatenate %45, %46, %47, %48 in 2 : vector<4x8x8xf32>, vector<4x8x8xf32>, vector<4x8x8xf32>, vector<4x8x8xf32> -> vector<4x8x32xf32>
    %50 = vector.shape_cast %49 : vector<4x8x32xf32> to vector<32x32xf32>
    %51 = arith.truncf %50 : vector<32x32xf32> to vector<32x32xbf16>
    %c0_12 = arith.constant 0 : index
    %c0_13 = arith.constant 0 : index
    %52 = vector.load %arg4[%c0_12, %c0_13] : memref<32x32xbf16, #tpu.memory_space<vmem>>, vector<32x32xbf16>
    %cst_14 = arith.constant dense<0.000000e+00> : vector<32x32xf32>
    %53 = tpu.matmul %51, %52, %cst_14 {dimension_numbers = #tpu.dot_dimension_numbers<[1], [0], [0], [1], [0, 0, 1, 1], [], []>} : vector<32x32xbf16>, vector<32x32xbf16>, vector<32x32xf32> -> vector<32x32xf32>
    %c0_15 = arith.constant 0 : index
    %c0_16 = arith.constant 0 : index
    %54 = vector.load %arg5[%c0_15, %c0_16] : memref<1x32xf32, #tpu.memory_space<vmem>>, vector<1x32xf32>
    %55 = vector.shape_cast %54 : vector<1x32xf32> to vector<32xf32>
    %56 = vector.shape_cast %55 : vector<32xf32> to vector<1x32xf32>
    %57 = vector.broadcast %56 : vector<1x32xf32> to vector<32x32xf32>
    %58 = arith.addf %53, %57 : vector<32x32xf32>
    %c0_17 = arith.constant 0 : index
    %c0_18 = arith.constant 0 : index
    %59 = vector.load %arg6[%c0_17, %c0_18] : memref<32x32xf32, #tpu.memory_space<vmem>>, vector<32x32xf32>
    tpu.vector_store %arg6[%c0_17, %c0_18], %58 {strides = array<i32>} : memref<32x32xf32, #tpu.memory_space<vmem>>, vector<32x32xf32>,
    return
  }
  func.func @transform_0(%arg0: i32) -> (i32, i32) {
    %c0_i32 = arith.constant 0 : i32
    %c0_i32_0 = arith.constant 0 : i32
    return %arg0, %c0_i32 : i32, i32
  }
  func.func @transform_1(%arg0: i32) -> (i32, i32) {
    %c0_i32 = arith.constant 0 : i32
    %c0_i32_0 = arith.constant 0 : i32
    %c0_i32_1 = arith.constant 0 : i32
    return %c0_i32, %c0_i32_0 : i32, i32
  }
  func.func @transform_2(%arg0: i32) -> (i32, i32) {
    %c0_i32 = arith.constant 0 : i32
    %c0_i32_0 = arith.constant 0 : i32
    %c0_i32_1 = arith.constant 0 : i32
    return %c0_i32, %c0_i32_0 : i32, i32
  }
  func.func @transform_3(%arg0: i32) -> (i32, i32) {
    %c0_i32 = arith.constant 0 : i32
    %c0_i32_0 = arith.constant 0 : i32
    %c0_i32_1 = arith.constant 0 : i32
    return %c0_i32, %c0_i32_0 : i32, i32
  }
  func.func @transform_4(%arg0: i32) -> (i32, i32) {
    %c0_i32 = arith.constant 0 : i32
    %c0_i32_0 = arith.constant 0 : i32
    %c0_i32_1 = arith.constant 0 : i32
    return %c0_i32, %c0_i32_0 : i32, i32
  }
  func.func @transform_5(%arg0: i32) -> (i32, i32) {
    %c0_i32 = arith.constant 0 : i32
    %c0_i32_0 = arith.constant 0 : i32
    return %arg0, %c0_i32 : i32, i32
  }
  func.func @transform_6(%arg0: i32) -> (i32, i32, i32) {
    %c0_i32 = arith.constant 0 : i32
    %c0_i32_0 = arith.constant 0 : i32
    %c0_i32_1 = arith.constant 0 : i32
    return %arg0, %c0_i32, %c0_i32_0 : i32, i32, i32
  }
}

</mosaic_0001>

<llo_original>
// kernel: tpu_custom_call.1
$region0: #{tpu_custom_call.1}
  #allocation0 [shape = 'u32[]', space=smem, size = 0x4, offset = 0x4, fixed_abs, tag = 'smem constant byte address 0x4 - core index']
  #allocation1 [shape = 'u32[144,128]{1,0:T(1,128)}', space=vmem, size = 0x12000, scoped, tag = 'internal scratch']
  %s0 = inlined_call_operand.hbm [shape: bf16[64,32], index: 0, kind: input, shape index: {}]
  %s1 = inlined_call_operand.hbm [shape: bf16[32,96], index: 1, kind: input, shape index: {}]
  %s2 = inlined_call_operand.hbm [shape: f32[1,96], index: 2, kind: input, shape index: {}]
  %s3 = inlined_call_operand.hbm [shape: bf16[32,32], index: 3, kind: input, shape index: {}]
  %s4 = inlined_call_operand.hbm [shape: f32[1,32], index: 4, kind: input, shape index: {}]
  %s5 = inlined_call_operand.hbm [shape: f32[64,32], index: 5, kind: output, shape index: {0}]
  %s6 = inlined_call_operand.hbm [shape: f32[8,8,32], index: 6, kind: output, shape index: {1}]
  %7 = xla_tuple %s5, %s6
  %s8 = sld [smem:[#allocation0]]
  $region81: #{tpu_custom_call.1} parent=0
    _
  %s10 = ssub.s32 1, %s8
  %s11 = scalar_select 0, %s10, %s8
  $region1: #{tpu_custom_call.1} parent=0
    #allocation2 [shape = 'u8[16384]{0}', space=vmem, size = 0x4000, scoped, tag = 'input window, operand 0']
    #allocation3 [shape = 's32[2]{0}', space=sflag, size = 0x8, scoped, tag = 'scoped memory for tpu_custom_call.1']
    #allocation4 [shape = 's32[2]{0}', space=sflag, size = 0x8, scoped, tag = 'scoped memory for tpu_custom_call.1']
    #allocation5 [shape = 'u8[8192]{0}', space=vmem, size = 0x2000, scoped, tag = 'input window, operand 1, single buffered']
    #allocation6 [shape = 's32[1]{0}', space=sflag, size = 0x4, scoped, tag = 'scoped memory for tpu_custom_call.1']
    #allocation7 [shape = 'u8[512]{0}', space=vmem, size = 0x400, scoped, tag = 'input window, operand 2, single buffered']
    #allocation8 [shape = 'u8[8192]{0}', space=vmem, size = 0x2000, scoped, tag = 'input window, operand 3, single buffered']
    #allocation9 [shape = 's32[1]{0}', space=sflag, size = 0x4, scoped, tag = 'scoped memory for tpu_custom_call.1']
    #allocation10 [shape = 'u8[512]{0}', space=vmem, size = 0x400, scoped, tag = 'input window, operand 4, single buffered']
    #allocation11 [shape = 'u8[32768]{0}', space=vmem, size = 0x8000, scoped, tag = 'output window, operand 0']
    #allocation12 [shape = 'u8[32768]{0}', space=vmem, size = 0x8000, scoped, tag = 'output window, operand 1']
    #allocation13 [shape = 's32[2]{0}', space=sflag, size = 0x8, scoped, tag = 'scoped memory for tpu_custom_call.1']
    %12 = vsyncpa [#allocation3], 0
    %s13 = scalar_lea.sflag [#allocation3], 1
    %14 = vsyncpa %s13, 0
    %15 = vsyncpa [#allocation6], 0
    %16 = vsyncpa [#allocation9], 0
    %17 = vsyncpa [#allocation4], 0
    %s18 = scalar_lea.sflag [#allocation4], 1
    %19 = vsyncpa %s18, 0
    %20 = vsyncpa [#allocation13], 0
    %s21 = scalar_lea.sflag [#allocation13], 1
    %22 = vsyncpa %s21, 0
    loop: start=0, step=1, limit=4
    $region2: #{tpu_custom_call.1} parent=1 // loop_pre_header
      _
    $region3: #{tpu_custom_call.1} parent=1 // loop_header
      %s24 = sphi 0, %s28
      %p25 = scmp.ge.s32.totalorder %s24, 4
      %s34 = sphi 0, %s36
      %s37 = sphi 0, %s34
      %s38 = sphi 0, %s37
      %s54 = sphi 0, %s38
      %s58 = sphi 0, %s58
      %s60 = sphi 0, %s58
      %s61 = sphi 0, %s60
      %s75 = sphi 0, %s61
      %s79 = sphi 0, %s79
      %s81 = sphi 0, %s79
      %s82 = sphi 0, %s81
      %s96 = sphi 0, %s82
      %s100 = sphi 0, %s100
      %s102 = sphi 0, %s100
      %s103 = sphi 0, %s102
      %s117 = sphi 0, %s103
      %s121 = sphi 0, %s121
      %s123 = sphi 0, %s121
      %s124 = sphi 0, %s123
      %s138 = sphi 0, %s124
      %s144 = sphi 0, %s146
      %s147 = sphi 0, %s144
      %s148 = sphi 0, %s147
      %s164 = sphi 0, %s148
      %s170 = sphi 0, %s172
      %s173 = sphi 0, %s170
      %s174 = sphi 0, %s173
      %s190 = sphi 0, %s174
    $region4: #{tpu_custom_call.1} parent=1 // loop_header_branch
      %27 = sbr.rel (%p25) target = $region8
    $region5: #{tpu_custom_call.1} parent=1 // loop_body
      %s29 = ssub.s32 %s24, 1
      %s30 = ssub.s32 %s24, 2
      %s31 = sadd.s32 %s24, 1
      %s32 = ssub.s32 %s24, %s31
      %p33 = scmp.eq.s32.totalorder %s32, 0
      %s35 = sadd.s32 %s34, 1
      %s36 = scalar_select %p33, %s34, %s35
      %p39 = pneg %p33
      %p40 = scmp.eq.s32.totalorder %s24, 1
      %p41 = por %p39, %p40
      %p42 = scmp.ne.s32.totalorder %s34, %s37
      %p43 = scmp.eq.s32.totalorder %s24, 0
      %p44 = por %p42, %p43
      %p45 = scmp.ne.s32.totalorder %s34, %s37
      %p46 = scmp.eq.s32.totalorder %s29, 1
      %p47 = por %p45, %p46
      %p48 = scmp.ne.s32.totalorder %s37, %s38
      %p49 = scmp.eq.s32.totalorder %s29, 0
      %p50 = por %p48, %p49
      %p51 = scmp.ne.s32.totalorder %s37, %s38
      %p52 = scmp.eq.s32.totalorder %s30, 1
      %p53 = por %p51, %p52
      %p55 = scmp.ne.s32.totalorder %s38, %s54
      %p56 = scmp.eq.s32.totalorder %s30, 0
      %p57 = por %p55, %p56
      %s59 = sadd.s32 %s58, 1
      %p62 = scmp.eq.s32.totalorder %s24, 1
      %p63 = scmp.ne.s32.totalorder %s58, %s60
      %p64 = scmp.eq.s32.totalorder %s24, 0
      %p65 = por %p63, %p64
      %p66 = scmp.ne.s32.totalorder %s58, %s60
      %p67 = scmp.eq.s32.totalorder %s29, 1
      %p68 = por %p66, %p67
      %p69 = scmp.ne.s32.totalorder %s60, %s61
      %p70 = scmp.eq.s32.totalorder %s29, 0
      %p71 = por %p69, %p70
      %p72 = scmp.ne.s32.totalorder %s60, %s61
      %p73 = scmp.eq.s32.totalorder %s30, 1
      %p74 = por %p72, %p73
      %p76 = scmp.ne.s32.totalorder %s61, %s75
      %p77 = scmp.eq.s32.totalorder %s30, 0
      %p78 = por %p76, %p77
      %s80 = sadd.s32 %s79, 1
      %p83 = scmp.eq.s32.totalorder %s24, 1
      %p84 = scmp.ne.s32.totalorder %s79, %s81
      %p85 = scmp.eq.s32.totalorder %s24, 0
      %p86 = por %p84, %p85
      %p87 = scmp.ne.s32.totalorder %s79, %s81
      %p88 = scmp.eq.s32.totalorder %s29, 1
      %p89 = por %p87, %p88
      %p90 = scmp.ne.s32.totalorder %s81, %s82
      %p91 = scmp.eq.s32.totalorder %s29, 0
      %p92 = por %p90, %p91
      %p93 = scmp.ne.s32.totalorder %s81, %s82
      %p94 = scmp.eq.s32.totalorder %s30, 1
      %p95 = por %p93, %p94
      %p97 = scmp.ne.s32.totalorder %s82, %s96
      %p98 = scmp.eq.s32.totalorder %s30, 0
      %p99 = por %p97, %p98
      %s101 = sadd.s32 %s100, 1
      %p104 = scmp.eq.s32.totalorder %s24, 1
      %p105 = scmp.ne.s32.totalorder %s100, %s102
      %p106 = scmp.eq.s32.totalorder %s24, 0
      %p107 = por %p105, %p106
      %p108 = scmp.ne.s32.totalorder %s100, %s102
      %p109 = scmp.eq.s32.totalorder %s29, 1
      %p110 = por %p108, %p109
      %p111 = scmp.ne.s32.totalorder %s102, %s103
      %p112 = scmp.eq.s32.totalorder %s29, 0
      %p113 = por %p111, %p112
      %p114 = scmp.ne.s32.totalorder %s102, %s103
      %p115 = scmp.eq.s32.totalorder %s30, 1
      %p116 = por %p114, %p115
      %p118 = scmp.ne.s32.totalorder %s103, %s117
      %p119 = scmp.eq.s32.totalorder %s30, 0
      %p120 = por %p118, %p119
      %s122 = sadd.s32 %s121, 1
      %p125 = scmp.eq.s32.totalorder %s24, 1
      %p126 = scmp.ne.s32.totalorder %s121, %s123
      %p127 = scmp.eq.s32.totalorder %s24, 0
      %p128 = por %p126, %p127
      %p129 = scmp.ne.s32.totalorder %s121, %s123
      %p130 = scmp.eq.s32.totalorder %s29, 1
      %p131 = por %p129, %p130
      %p132 = scmp.ne.s32.totalorder %s123, %s124
      %p133 = scmp.eq.s32.totalorder %s29, 0
      %p134 = por %p132, %p133
      %p135 = scmp.ne.s32.totalorder %s123, %s124
      %p136 = scmp.eq.s32.totalorder %s30, 1
      %p137 = por %p135, %p136
      %p139 = scmp.ne.s32.totalorder %s124, %s138
      %p140 = scmp.eq.s32.totalorder %s30, 0
      %p141 = por %p139, %p140
      %s142 = ssub.s32 %s24, %s31
      %p143 = scmp.eq.s32.totalorder %s142, 0
      %s145 = sadd.s32 %s144, 1
      %s146 = scalar_select %p143, %s144, %s145
      %p149 = pneg %p143
      %p150 = scmp.eq.s32.totalorder %s24, 1
      %p151 = por %p149, %p150
      %p152 = scmp.ne.s32.totalorder %s144, %s147
      %p153 = scmp.eq.s32.totalorder %s24, 0
      %p154 = por %p152, %p153
      %p155 = scmp.ne.s32.totalorder %s144, %s147
      %p156 = scmp.eq.s32.totalorder %s29, 1
      %p157 = por %p155, %p156
      %p158 = scmp.ne.s32.totalorder %s147, %s148
      %p159 = scmp.eq.s32.totalorder %s29, 0
      %p160 = por %p158, %p159
      %p161 = scmp.ne.s32.totalorder %s147, %s148
      %p162 = scmp.eq.s32.totalorder %s30, 1
      %p163 = por %p161, %p162
      %p165 = scmp.ne.s32.totalorder %s148, %s164
      %p166 = scmp.eq.s32.totalorder %s30, 0
      %p167 = por %p165, %p166
      %s168 = ssub.s32 %s24, %s31
      %p169 = scmp.eq.s32.totalorder %s168, 0
      %s171 = sadd.s32 %s170, 1
      %s172 = scalar_select %p169, %s170, %s171
      %p175 = pneg %p169
      %p176 = scmp.eq.s32.totalorder %s24, 1
      %p177 = por %p175, %p176
      %p178 = scmp.ne.s32.totalorder %s170, %s173
      %p179 = scmp.eq.s32.totalorder %s24, 0
      %p180 = por %p178, %p179
      %p181 = scmp.ne.s32.totalorder %s170, %s173
      %p182 = scmp.eq.s32.totalorder %s29, 1
      %p183 = por %p181, %p182
      %p184 = scmp.ne.s32.totalorder %s173, %s174
      %p185 = scmp.eq.s32.totalorder %s29, 0
      %p186 = por %p184, %p185
      %p187 = scmp.ne.s32.totalorder %s173, %s174
      %p188 = scmp.eq.s32.totalorder %s30, 1
      %p189 = por %p187, %p188
      %p191 = scmp.ne.s32.totalorder %s174, %s190
      %p192 = scmp.eq.s32.totalorder %s30, 0
      %p193 = por %p191, %p192
      %p194 = scmp.le.s32.totalorder 1, %s24
      %p195 = scmp.lt.s32.totalorder %s24, 3
      %p196 = pnand %p194, %p195
      %p197 = pneg %p196
      // Predicated region
      $region9: #{tpu_custom_call.1} parent=5 // pred_check
        _
      $region10: #{tpu_custom_call.1} parent=5 // pred_check_branch
        %199 = sbr.rel (%p196) target = $region12
      $region11: #{tpu_custom_call.1} parent=5 // pred_region
        %s200 = ssub.s32 %s24, 1
        // Predicated region
        $region13: #{tpu_custom_call.1} parent=11 // pred_check
          %p201 = pneg %p71
        $region14: #{tpu_custom_call.1} parent=11 // pred_check_branch
          %203 = sbr.rel (%p201) target = $region16
        $region15: #{tpu_custom_call.1} parent=11 // pred_region
          %s205 = ssub.s32 256, 256
          %206 = vsyncadd [#allocation6], %s205
          %s207 = sshll.u32 [#allocation5], 4
          %s208 = int_to_ptr.vmem [resolvable:$true] %s207
          %213 = dma.hbm_to_vmem [thread:$0]  %s1, 256, %s208, [#allocation6], 64, 64, 4
        $region16: #{tpu_custom_call.1} parent=11 // pred_fallthru
          _
        // Predicated region
        $region17: #{tpu_custom_call.1} parent=11 // pred_check
          %p214 = pneg %p92
        $region18: #{tpu_custom_call.1} parent=11 // pred_check_branch
          %216 = sbr.rel (%p214) target = $region20
        $region19: #{tpu_custom_call.1} parent=11 // pred_region
          %s218 = ssub.s32 16, 16
          %219 = vsyncadd [#allocation6], %s218
          %s221 = sshll.u32 [#allocation7], 4
          %s222 = int_to_ptr.vmem [resolvable:$true] %s221
          %224 = dma.hbm_to_vmem [thread:$0]  %s2, 16, %s222, [#allocation6]
        $region20: #{tpu_custom_call.1} parent=11 // pred_fallthru
          _
        // Predicated region
        $region21: #{tpu_custom_call.1} parent=11 // pred_check
          %p225 = pneg %p113
        $region22: #{tpu_custom_call.1} parent=11 // pred_check_branch
          %227 = sbr.rel (%p225) target = $region24
        $region23: #{tpu_custom_call.1} parent=11 // pred_region
          %s229 = ssub.s32 256, 256
          %230 = vsyncadd [#allocation9], %s229
          %s231 = sshll.u32 [#allocation8], 4
          %s232 = int_to_ptr.vmem [resolvable:$true] %s231
          %237 = dma.hbm_to_vmem [thread:$0]  %s3, 256, %s232, [#allocation9], 64, 64, 4
        $region24: #{tpu_custom_call.1} parent=11 // pred_fallthru
          _
        // Predicated region
        $region25: #{tpu_custom_call.1} parent=11 // pred_check
          %p238 = pneg %p134
        $region26: #{tpu_custom_call.1} parent=11 // pred_check_branch
          %240 = sbr.rel (%p238) target = $region28
        $region27: #{tpu_custom_call.1} parent=11 // pred_region
          %s242 = ssub.s32 16, 16
          %243 = vsyncadd [#allocation9], %s242
          %s245 = sshll.u32 [#allocation10], 4
          %s246 = int_to_ptr.vmem [resolvable:$true] %s245
          %248 = dma.hbm_to_vmem [thread:$0]  %s4, 16, %s246, [#allocation9]
        $region28: #{tpu_custom_call.1} parent=11 // pred_fallthru
          _
      $region12: #{tpu_custom_call.1} parent=5 // pred_fallthru
        _
      %p249 = scmp.lt.s32.totalorder %s24, 2
      // Predicated region
      $region29: #{tpu_custom_call.1} parent=5 // pred_check
        %p250 = pneg %p249
      $region30: #{tpu_custom_call.1} parent=5 // pred_check_branch
        %252 = sbr.rel (%p250) target = $region32
      $region31: #{tpu_custom_call.1} parent=5 // pred_region
        // Predicated region
        $region33: #{tpu_custom_call.1} parent=31 // pred_check
          %p253 = pneg %p44
        $region34: #{tpu_custom_call.1} parent=31 // pred_check_branch
          %255 = sbr.rel (%p253) target = $region36
        $region35: #{tpu_custom_call.1} parent=31 // pred_region
          %s256 = sand.u32 %s34, 1
          %s257 = scalar_lea.sflag [#allocation3], %s256
          %s258 = sand.u32 %s34, 1
          %s259 = smul.addr %s258, 16
          %s260 = scalar_lea.vmem [#allocation2], %s259
          %s261 = smul.u32 4, %s24
          %s263 = ssub.s32 256, 256
          %264 = vsyncadd %s257, %s263
          %s265 = smul.addr %s261, 64
          %s266 = scalar_lea.hbm %s0, %s265
          %s267 = sshll.u32 %s260, 4
          %s268 = int_to_ptr.vmem [resolvable:$true] %s267
          %273 = dma.hbm_to_vmem [thread:$0]  %s266, 256, %s268, %s257, 64, 64, 4
        $region36: #{tpu_custom_call.1} parent=31 // pred_fallthru
          _
      $region32: #{tpu_custom_call.1} parent=5 // pred_fallthru
        _
      %p274 = scmp.le.s32.totalorder 1, %s24
      %p275 = scmp.lt.s32.totalorder %s24, 3
      %p276 = pnand %p274, %p275
      %p277 = pneg %p276
      // Predicated region
      $region37: #{tpu_custom_call.1} parent=5 // pred_check
        _
      $region38: #{tpu_custom_call.1} parent=5 // pred_check_branch
        %279 = sbr.rel (%p276) target = $region40
      $region39: #{tpu_custom_call.1} parent=5 // pred_region
        %s280 = ssub.s32 %s24, 1
        %s281 = sand.u32 %s37, 1
        %s282 = scalar_lea.sflag [#allocation3], %s281
        %s283 = sand.u32 %s37, 1
        %s284 = smul.addr %s283, 16
        %s285 = scalar_lea.vmem [#allocation2], %s284
        // Predicated region
        $region41: #{tpu_custom_call.1} parent=39 // pred_check
          %p286 = pneg %p50
        $region42: #{tpu_custom_call.1} parent=39 // pred_check_branch
          %288 = sbr.rel (%p286) target = $region44
        $region43: #{tpu_custom_call.1} parent=39 // pred_region
          %289 = dma.done %s282, 256
        $region44: #{tpu_custom_call.1} parent=39 // pred_fallthru
          _
        // Predicated region
        $region45: #{tpu_custom_call.1} parent=39 // pred_check
          %p290 = pneg %p71
        $region46: #{tpu_custom_call.1} parent=39 // pred_check_branch
          %292 = sbr.rel (%p290) target = $region48
        $region47: #{tpu_custom_call.1} parent=39 // pred_region
          %293 = dma.done [#allocation6], 256
        $region48: #{tpu_custom_call.1} parent=39 // pred_fallthru
          _
        // Predicated region
        $region49: #{tpu_custom_call.1} parent=39 // pred_check
          %p294 = pneg %p92
        $region50: #{tpu_custom_call.1} parent=39 // pred_check_branch
          %296 = sbr.rel (%p294) target = $region52
        $region51: #{tpu_custom_call.1} parent=39 // pred_region
          %297 = dma.done [#allocation6], 16
        $region52: #{tpu_custom_call.1} parent=39 // pred_fallthru
          _
        // Predicated region
        $region53: #{tpu_custom_call.1} parent=39 // pred_check
          %p298 = pneg %p113
        $region54: #{tpu_custom_call.1} parent=39 // pred_check_branch
          %300 = sbr.rel (%p298) target = $region56
        $region55: #{tpu_custom_call.1} parent=39 // pred_region
          %301 = dma.done [#allocation9], 256
        $region56: #{tpu_custom_call.1} parent=39 // pred_fallthru
          _
        // Predicated region
        $region57: #{tpu_custom_call.1} parent=39 // pred_check
          %p302 = pneg %p134
        $region58: #{tpu_custom_call.1} parent=39 // pred_check_branch
          %304 = sbr.rel (%p302) target = $region60
        $region59: #{tpu_custom_call.1} parent=39 // pred_region
          %305 = dma.done [#allocation9], 16
        $region60: #{tpu_custom_call.1} parent=39 // pred_fallthru
          _
        %s306 = sand.u32 %s37, 1
        %s307 = scalar_lea.sflag [#allocation3], %s306
        %s308 = sand.u32 %s37, 1
        %s309 = smul.addr %s308, 16
        %s310 = scalar_lea.vmem [#allocation2], %s309
        %p311 = pneg %p50
        %p312 = pneg %p47
        %p313 = pneg %p71
        %p314 = pneg %p68
        %p315 = pneg %p92
        %p316 = pneg %p89
        %p317 = pneg %p113
        %p318 = pneg %p110
        %p319 = pneg %p134
        %p320 = pneg %p131
        %p321 = pneg %p160
        %p322 = pneg %p157
        %s323 = sand.u32 %s147, 1
        %s324 = scalar_lea.sflag [#allocation4], %s323
        %s325 = sand.u32 %s147, 1
        %s326 = smul.addr %s325, 32
        %s327 = scalar_lea.vmem [#allocation11], %s326
        %p328 = pneg %p186
        %p329 = pneg %p183
        %s330 = sand.u32 %s173, 1
        %s331 = scalar_lea.sflag [#allocation13], %s330
        %s332 = sand.u32 %s173, 1
        %s333 = smul.addr %s332, 32
        %s334 = scalar_lea.vmem [#allocation12], %s333
        %s335 = smul.u32 4, %s29
        %s336 = smul.u32 4, %s29
        %s337 = smul.u32 4, %s29
        %v339 = vld [vmem:[%s285] sm:$0xf]
        %v340 = vld [vmem:[%s285 + $0x4] sm:$0xf]
        %v341 = vld [vmem:[%s285 + $0x8] sm:$0xf]
        %v342 = vld [vmem:[%s285 + $0xc] sm:$0xf]
        %v343 = vld [vmem:[#allocation5] sm:$0xf]
        %v344 = vld [vmem:[#allocation5 + $0x4] sm:$0xf]
        %v345 = vld [vmem:[#allocation5 + $0x8] sm:$0xf]
        %v346 = vld [vmem:[#allocation5 + $0xc] sm:$0xf]
        %v347 = vld [vmem:[#allocation7] sm:$0x1]
        %v349 = vlaneseq
        %v350 = vshrl.u32 %v349, 7
        %v351 = vsub.s32 0, %v350
        %v352 = vrot.slane %v347, %v351
        %v358 = vunpack.c.l.b16 %v339
        %v359 = vunpack.c.l.b16 %v340
        %v360 = vunpack.c.l.b16 %v341
        %v361 = vunpack.c.l.b16 %v342
        %v362 = vpack.c.b16 %v359, %v358
        %v363 = vpack.c.b16 %v361, %v360
        %v368 = vunpack.c.l.b16 %v343
        %v369 = vunpack.c.l.b16 %v344
        %v370 = vunpack.c.l.b16 %v345
        %v371 = vunpack.c.l.b16 %v346
        %v372 = vpack.c.b16 %v369, %v368
        %v373 = vpack.c.b16 %v371, %v370
        %vm376 = vcmask 261120
        %v378 = vsel %vm376, %v362, 0
        %v381 = vsel %vm376, %v363, 0
        %383 = vmatprep.subr.bf16.mxu0 0
        %384 = vmatpush1.bf16.msra.mxu0 %v372
        %385 = vmatprep.subr.bf16.mxu0 0
        %386 = vmatpush1.bf16.msra.mxu0 %v373
        %387 = vmatprep.subr.bf16.mxu0 0
        %388 = vmatpush1.bf16.msra.mxu0 0
        %389 = vmatprep.subr.bf16.mxu0 0
        %390 = vmatpush1.bf16.msra.mxu0 0
        %391 = vmatprep.subr.bf16.mxu0 0
        %392 = vmatpush1.bf16.msra.mxu0 0
        %393 = vmatprep.subr.bf16.mxu0 0
        %394 = vmatpush1.bf16.msra.mxu0 0
        %395 = vmatprep.subr.bf16.mxu0 0
        %396 = vmatpush1.bf16.msra.mxu0 0
        %397 = vmatprep.subr.bf16.mxu0 0
        %398 = vmatpush1.bf16.msra.mxu0 0
        %399 = vmatprep.subr.bf16.mxu0 0
        %400 = vmatpush1.bf16.msra.mxu0 0
        %401 = vmatprep.subr.bf16.mxu0 0
        %402 = vmatpush1.bf16.msra.mxu0 0
        %403 = vmatprep.subr.bf16.mxu0 0
        %404 = vmatpush1.bf16.msra.mxu0 0
        %405 = vmatprep.subr.bf16.mxu0 0
        %406 = vmatpush1.bf16.msra.mxu0 0
        %407 = vmatprep.subr.bf16.mxu0 0
        %408 = vmatpush1.bf16.msra.mxu0 0
        %409 = vmatprep.subr.bf16.mxu0 0
        %410 = vmatpush1.bf16.msra.mxu0 0
        %411 = vmatprep.subr.bf16.mxu0 0
        %412 = vmatpush1.bf16.msra.mxu0 0
        %413 = vmatprep.subr.bf16.mxu0 0
        %414 = vmatpush1.bf16.msra.mxu0 0
        %415 = vmatprep.mubr.bf16.mxu0 0
        %416 = vmatmul.mubr.bf16.gmra.mrb[0].mxu0 %v378
        %v417 = vpop.f32.mrb[0].mxu0
        %v418 = vadd.f32 %v352, %v417
        %v419 = vpop.f32.mrb[0].mxu0
        %v420 = vpop.f32.mrb[0].mxu0
        %v421 = vadd.f32 %v352, %v420
        %v422 = vpop.f32.mrb[0].mxu0
        %423 = vmatprep.mubr.bf16.mxu0 0
        %424 = vmatmul.mubr.bf16.gmra.mrb[0].mxu0 %v381
        %v425 = vpop.f32.mrb[0].mxu0
        %v426 = vadd.f32 %v352, %v425
        %v427 = vpop.f32.mrb[0].mxu0
        %v428 = vpop.f32.mrb[0].mxu0
        %v429 = vadd.f32 %v352, %v428
        %v430 = vpop.f32.mrb[0].mxu0
        %431 = vdwg.mxu0
        %436 = vrot.lane.b32.xlu0 %v418, 120
        %v437 = vpop.permute.xlu0 %436
        %438 = vrot.lane.b32.xlu0 %v421, 120
        %v439 = vpop.permute.xlu0 %438
        %440 = vrot.lane.b32.xlu0 %v426, 120
        %v441 = vpop.permute.xlu0 %440
        %442 = vrot.lane.b32.xlu0 %v429, 120
        %v443 = vpop.permute.xlu0 %442
        %448 = vrot.lane.b32.xlu0 %v418, 112
        %v449 = vpop.permute.xlu0 %448
        %450 = vrot.lane.b32.xlu0 %v421, 112
        %v451 = vpop.permute.xlu0 %450
        %452 = vrot.lane.b32.xlu0 %v426, 112
        %v453 = vpop.permute.xlu0 %452
        %454 = vrot.lane.b32.xlu0 %v429, 112
        %v455 = vpop.permute.xlu0 %454
        %460 = vrot.lane.b32.xlu0 %v418, 104
        %v461 = vpop.permute.xlu0 %460
        %462 = vrot.lane.b32.xlu0 %v421, 104
        %v463 = vpop.permute.xlu0 %462
        %464 = vrot.lane.b32.xlu0 %v426, 104
        %v465 = vpop.permute.xlu0 %464
        %466 = vrot.lane.b32.xlu0 %v429, 104
        %v467 = vpop.permute.xlu0 %466
        %v472 = vpack.c.bf16 %v418, %v418
        %v473 = vpack.c.bf16 %v421, %v421
        %v474 = vpack.c.bf16 %v426, %v426
        %v475 = vpack.c.bf16 %v429, %v429
        %v476 = vpack.c.bf16 %v437, %v437
        %v477 = vpack.c.bf16 %v439, %v439
        %v478 = vpack.c.bf16 %v441, %v441
        %v479 = vpack.c.bf16 %v443, %v443
        %v480 = vpack.c.bf16 %v449, %v449
        %v481 = vpack.c.bf16 %v451, %v451
        %v482 = vpack.c.bf16 %v453, %v453
        %v483 = vpack.c.bf16 %v455, %v455
        %v484 = vpack.c.bf16 %v461, %v461
        %v485 = vpack.c.bf16 %v463, %v463
        %v486 = vpack.c.bf16 %v465, %v465
        %v487 = vpack.c.bf16 %v467, %v467
        %489 = vrot.lane.b32.xlu0 %v472, 96
        %v490 = vpop.permute.xlu0 %489
        %vm491 = vcmask 64512
        %v493 = vsel %vm491, %v472, 0
        %v496 = vsel %vm491, %v490, 0
        %498 = vmatprep.subr.bf16.mxu0 0
        %499 = vmatpush1.bf16.xpose.msra.mxu0 %v496
        %500 = vmatprep.subr.bf16.mxu0 0
        %501 = vmatpush1.bf16.xpose.msra.mxu0 0
        %502 = vmatprep.subr.bf16.mxu0 0
        %503 = vmatpush1.bf16.xpose.msra.mxu0 0
        %504 = vmatprep.subr.bf16.mxu0 0
        %505 = vmatpush1.bf16.xpose.msra.mxu0 0
        %506 = vmatprep.subr.bf16.mxu0 0
        %507 = vmatpush1.bf16.xpose.msra.mxu0 0
        %508 = vmatprep.subr.bf16.mxu0 0
        %509 = vmatpush1.bf16.xpose.msra.mxu0 0
        %510 = vmatprep.subr.bf16.mxu0 0
        %511 = vmatpush1.bf16.xpose.msra.mxu0 0
        %512 = vmatprep.subr.bf16.mxu0 0
        %513 = vmatpush1.bf16.xpose.msra.mxu0 0
        %514 = vmatprep.subr.bf16.mxu0 0
        %515 = vmatpush1.bf16.xpose.msra.mxu0 0
        %516 = vmatprep.subr.bf16.mxu0 0
        %517 = vmatpush1.bf16.xpose.msra.mxu0 0
        %518 = vmatprep.subr.bf16.mxu0 0
        %519 = vmatpush1.bf16.xpose.msra.mxu0 0
        %520 = vmatprep.subr.bf16.mxu0 0
        %521 = vmatpush1.bf16.xpose.msra.mxu0 0
        %522 = vmatprep.subr.bf16.mxu0 0
        %523 = vmatpush1.bf16.xpose.msra.mxu0 0
        %524 = vmatprep.subr.bf16.mxu0 0
        %525 = vmatpush1.bf16.xpose.msra.mxu0 0
        %526 = vmatprep.subr.bf16.mxu0 0
        %527 = vmatpush1.bf16.xpose.msra.mxu0 0
        %528 = vmatprep.subr.bf16.mxu0 0
        %529 = vmatpush1.bf16.xpose.msra.mxu0 0
        %530 = vmatprep.mubr.bf16.mxu0 0
        %531 = vmatmul.mubr.bf16.gmra.mrb[0].mxu0 %v493
        %v532 = vpop.f32.mrb[0].mxu0
        %v533 = vadd.f32 0.0, %v532
        %v534 = vpop.f32.mrb[0].mxu0
        %v535 = vpop.f32.mrb[0].mxu0
        %v536 = vpop.f32.mrb[0].mxu0
        %537 = vdwg.mxu0
        %539 = vrot.lane.b32.xlu0 %v473, 96
        %v540 = vpop.permute.xlu0 %539
        %v542 = vsel %vm491, %v473, 0
        %v545 = vsel %vm491, %v540, 0
        %547 = vmatprep.subr.bf16.mxu0 0
        %548 = vmatpush1.bf16.xpose.msra.mxu0 %v545
        %549 = vmatprep.subr.bf16.mxu0 0
        %550 = vmatpush1.bf16.xpose.msra.mxu0 0
        %551 = vmatprep.subr.bf16.mxu0 0
        %552 = vmatpush1.bf16.xpose.msra.mxu0 0
        %553 = vmatprep.subr.bf16.mxu0 0
        %554 = vmatpush1.bf16.xpose.msra.mxu0 0
        %555 = vmatprep.subr.bf16.mxu0 0
        %556 = vmatpush1.bf16.xpose.msra.mxu0 0
        %557 = vmatprep.subr.bf16.mxu0 0
        %558 = vmatpush1.bf16.xpose.msra.mxu0 0
        %559 = vmatprep.subr.bf16.mxu0 0
        %560 = vmatpush1.bf16.xpose.msra.mxu0 0
        %561 = vmatprep.subr.bf16.mxu0 0
        %562 = vmatpush1.bf16.xpose.msra.mxu0 0
        %563 = vmatprep.subr.bf16.mxu0 0
        %564 = vmatpush1.bf16.xpose.msra.mxu0 0
        %565 = vmatprep.subr.bf16.mxu0 0
        %566 = vmatpush1.bf16.xpose.msra.mxu0 0
        %567 = vmatprep.subr.bf16.mxu0 0
        %568 = vmatpush1.bf16.xpose.msra.mxu0 0
        %569 = vmatprep.subr.bf16.mxu0 0
        %570 = vmatpush1.bf16.xpose.msra.mxu0 0
        %571 = vmatprep.subr.bf16.mxu0 0
        %572 = vmatpush1.bf16.xpose.msra.mxu0 0
        %573 = vmatprep.subr.bf16.mxu0 0
        %574 = vmatpush1.bf16.xpose.msra.mxu0 0
        %575 = vmatprep.subr.bf16.mxu0 0
        %576 = vmatpush1.bf16.xpose.msra.mxu0 0
        %577 = vmatprep.subr.bf16.mxu0 0
        %578 = vmatpush1.bf16.xpose.msra.mxu0 0
        %579 = vmatprep.mubr.bf16.mxu0 0
        %580 = vmatmul.mubr.bf16.gmra.mrb[0].mxu0 %v542
        %v581 = vpop.f32.mrb[0].mxu0
        %v582 = vadd.f32 0.0, %v581
        %v583 = vpop.f32.mrb[0].mxu0
        %v584 = vpop.f32.mrb[0].mxu0
        %v585 = vpop.f32.mrb[0].mxu0
        %586 = vdwg.mxu0
        %588 = vrot.lane.b32.xlu0 %v474, 96
        %v589 = vpop.permute.xlu0 %588
        %v591 = vsel %vm491, %v474, 0
        %v594 = vsel %vm491, %v589, 0
        %596 = vmatprep.subr.bf16.mxu0 0
        %597 = vmatpush1.bf16.xpose.msra.mxu0 %v594
        %598 = vmatprep.subr.bf16.mxu0 0
        %599 = vmatpush1.bf16.xpose.msra.mxu0 0
        %600 = vmatprep.subr.bf16.mxu0 0
        %601 = vmatpush1.bf16.xpose.msra.mxu0 0
        %602 = vmatprep.subr.bf16.mxu0 0
        %603 = vmatpush1.bf16.xpose.msra.mxu0 0
        %604 = vmatprep.subr.bf16.mxu0 0
        %605 = vmatpush1.bf16.xpose.msra.mxu0 0
        %606 = vmatprep.subr.bf16.mxu0 0
        %607 = vmatpush1.bf16.xpose.msra.mxu0 0
        %608 = vmatprep.subr.bf16.mxu0 0
        %609 = vmatpush1.bf16.xpose.msra.mxu0 0
        %610 = vmatprep.subr.bf16.mxu0 0
        %611 = vmatpush1.bf16.xpose.msra.mxu0 0
        %612 = vmatprep.subr.bf16.mxu0 0
        %613 = vmatpush1.bf16.xpose.msra.mxu0 0
        %614 = vmatprep.subr.bf16.mxu0 0
        %615 = vmatpush1.bf16.xpose.msra.mxu0 0
        %616 = vmatprep.subr.bf16.mxu0 0
        %617 = vmatpush1.bf16.xpose.msra.mxu0 0
        %618 = vmatprep.subr.bf16.mxu0 0
        %619 = vmatpush1.bf16.xpose.msra.mxu0 0
        %620 = vmatprep.subr.bf16.mxu0 0
        %621 = vmatpush1.bf16.xpose.msra.mxu0 0
        %622 = vmatprep.subr.bf16.mxu0 0
        %623 = vmatpush1.bf16.xpose.msra.mxu0 0
        %624 = vmatprep.subr.bf16.mxu0 0
        %625 = vmatpush1.bf16.xpose.msra.mxu0 0
        %626 = vmatprep.subr.bf16.mxu0 0
        %627 = vmatpush1.bf16.xpose.msra.mxu0 0
        %628 = vmatprep.mubr.bf16.mxu0 0
        %629 = vmatmul.mubr.bf16.gmra.mrb[0].mxu0 %v591
        %v630 = vpop.f32.mrb[0].mxu0
        %v631 = vadd.f32 0.0, %v630
        %v632 = vpop.f32.mrb[0].mxu0
        %v633 = vpop.f32.mrb[0].mxu0
        %v634 = vpop.f32.mrb[0].mxu0
        %635 = vdwg.mxu0
        %637 = vrot.lane.b32.xlu0 %v475, 96
        %v638 = vpop.permute.xlu0 %637
        %v640 = vsel %vm491, %v475, 0
        %v643 = vsel %vm491, %v638, 0
        %645 = vmatprep.subr.bf16.mxu0 0
        %646 = vmatpush1.bf16.xpose.msra.mxu0 %v643
        %647 = vmatprep.subr.bf16.mxu0 0
        %648 = vmatpush1.bf16.xpose.msra.mxu0 0
        %649 = vmatprep.subr.bf16.mxu0 0
        %650 = vmatpush1.bf16.xpose.msra.mxu0 0
        %651 = vmatprep.subr.bf16.mxu0 0
        %652 = vmatpush1.bf16.xpose.msra.mxu0 0
        %653 = vmatprep.subr.bf16.mxu0 0
        %654 = vmatpush1.bf16.xpose.msra.mxu0 0
        %655 = vmatprep.subr.bf16.mxu0 0
        %656 = vmatpush1.bf16.xpose.msra.mxu0 0
        %657 = vmatprep.subr.bf16.mxu0 0
        %658 = vmatpush1.bf16.xpose.msra.mxu0 0
        %659 = vmatprep.subr.bf16.mxu0 0
        %660 = vmatpush1.bf16.xpose.msra.mxu0 0
        %661 = vmatprep.subr.bf16.mxu0 0
        %662 = vmatpush1.bf16.xpose.msra.mxu0 0
        %663 = vmatprep.subr.bf16.mxu0 0
        %664 = vmatpush1.bf16.xpose.msra.mxu0 0
        %665 = vmatprep.subr.bf16.mxu0 0
        %666 = vmatpush1.bf16.xpose.msra.mxu0 0
        %667 = vmatprep.subr.bf16.mxu0 0
        %668 = vmatpush1.bf16.xpose.msra.mxu0 0
        %669 = vmatprep.subr.bf16.mxu0 0
        %670 = vmatpush1.bf16.xpose.msra.mxu0 0
        %671 = vmatprep.subr.bf16.mxu0 0
        %672 = vmatpush1.bf16.xpose.msra.mxu0 0
        %673 = vmatprep.subr.bf16.mxu0 0
        %674 = vmatpush1.bf16.xpose.msra.mxu0 0
        %675 = vmatprep.subr.bf16.mxu0 0
        %676 = vmatpush1.bf16.xpose.msra.mxu0 0
        %677 = vmatprep.mubr.bf16.mxu0 0
        %678 = vmatmul.mubr.bf16.gmra.mrb[0].mxu0 %v640
        %v679 = vpop.f32.mrb[0].mxu0
        %v680 = vadd.f32 0.0, %v679
        %v681 = vpop.f32.mrb[0].mxu0
        %v682 = vpop.f32.mrb[0].mxu0
        %v683 = vpop.f32.mrb[0].mxu0
        %684 = vdwg.mxu0
        %686 = vrot.lane.b32.xlu0 %v476, 96
        %v687 = vpop.permute.xlu0 %686
        %v689 = vsel %vm491, %v476, 0
        %v692 = vsel %vm491, %v687, 0
        %694 = vmatprep.subr.bf16.mxu0 0
        %695 = vmatpush1.bf16.xpose.msra.mxu0 %v692
        %696 = vmatprep.subr.bf16.mxu0 0
        %697 = vmatpush1.bf16.xpose.msra.mxu0 0
        %698 = vmatprep.subr.bf16.mxu0 0
        %699 = vmatpush1.bf16.xpose.msra.mxu0 0
        %700 = vmatprep.subr.bf16.mxu0 0
        %701 = vmatpush1.bf16.xpose.msra.mxu0 0
        %702 = vmatprep.subr.bf16.mxu0 0
        %703 = vmatpush1.bf16.xpose.msra.mxu0 0
        %704 = vmatprep.subr.bf16.mxu0 0
        %705 = vmatpush1.bf16.xpose.msra.mxu0 0
        %706 = vmatprep.subr.bf16.mxu0 0
        %707 = vmatpush1.bf16.xpose.msra.mxu0 0
        %708 = vmatprep.subr.bf16.mxu0 0
        %709 = vmatpush1.bf16.xpose.msra.mxu0 0
        %710 = vmatprep.subr.bf16.mxu0 0
        %711 = vmatpush1.bf16.xpose.msra.mxu0 0
        %712 = vmatprep.subr.bf16.mxu0 0
        %713 = vmatpush1.bf16.xpose.msra.mxu0 0
        %714 = vmatprep.subr.bf16.mxu0 0
        %715 = vmatpush1.bf16.xpose.msra.mxu0 0
        %716 = vmatprep.subr.bf16.mxu0 0
        %717 = vmatpush1.bf16.xpose.msra.mxu0 0
        %718 = vmatprep.subr.bf16.mxu0 0
        %719 = vmatpush1.bf16.xpose.msra.mxu0 0
        %720 = vmatprep.subr.bf16.mxu0 0
        %721 = vmatpush1.bf16.xpose.msra.mxu0 0
        %722 = vmatprep.subr.bf16.mxu0 0
        %723 = vmatpush1.bf16.xpose.msra.mxu0 0
        %724 = vmatprep.subr.bf16.mxu0 0
        %725 = vmatpush1.bf16.xpose.msra.mxu0 0
        %726 = vmatprep.mubr.bf16.mxu0 0
        %727 = vmatmul.mubr.bf16.gmra.mrb[0].mxu0 %v689
        %v728 = vpop.f32.mrb[0].mxu0
        %v729 = vadd.f32 0.0, %v728
        %v730 = vpop.f32.mrb[0].mxu0
        %v731 = vpop.f32.mrb[0].mxu0
        %v732 = vpop.f32.mrb[0].mxu0
        %733 = vdwg.mxu0
        %735 = vrot.lane.b32.xlu0 %v477, 96
        %v736 = vpop.permute.xlu0 %735
        %v738 = vsel %vm491, %v477, 0
        %v741 = vsel %vm491, %v736, 0
        %743 = vmatprep.subr.bf16.mxu0 0
        %744 = vmatpush1.bf16.xpose.msra.mxu0 %v741
        %745 = vmatprep.subr.bf16.mxu0 0
        %746 = vmatpush1.bf16.xpose.msra.mxu0 0
        %747 = vmatprep.subr.bf16.mxu0 0
        %748 = vmatpush1.bf16.xpose.msra.mxu0 0
        %749 = vmatprep.subr.bf16.mxu0 0
        %750 = vmatpush1.bf16.xpose.msra.mxu0 0
        %751 = vmatprep.subr.bf16.mxu0 0
        %752 = vmatpush1.bf16.xpose.msra.mxu0 0
        %753 = vmatprep.subr.bf16.mxu0 0
        %754 = vmatpush1.bf16.xpose.msra.mxu0 0
        %755 = vmatprep.subr.bf16.mxu0 0
        %756 = vmatpush1.bf16.xpose.msra.mxu0 0
        %757 = vmatprep.subr.bf16.mxu0 0
        %758 = vmatpush1.bf16.xpose.msra.mxu0 0
        %759 = vmatprep.subr.bf16.mxu0 0
        %760 = vmatpush1.bf16.xpose.msra.mxu0 0
        %761 = vmatprep.subr.bf16.mxu0 0
        %762 = vmatpush1.bf16.xpose.msra.mxu0 0
        %763 = vmatprep.subr.bf16.mxu0 0
        %764 = vmatpush1.bf16.xpose.msra.mxu0 0
        %765 = vmatprep.subr.bf16.mxu0 0
        %766 = vmatpush1.bf16.xpose.msra.mxu0 0
        %767 = vmatprep.subr.bf16.mxu0 0
        %768 = vmatpush1.bf16.xpose.msra.mxu0 0
        %769 = vmatprep.subr.bf16.mxu0 0
        %770 = vmatpush1.bf16.xpose.msra.mxu0 0
        %771 = vmatprep.subr.bf16.mxu0 0
        %772 = vmatpush1.bf16.xpose.msra.mxu0 0
        %773 = vmatprep.subr.bf16.mxu0 0
        %774 = vmatpush1.bf16.xpose.msra.mxu0 0
        %775 = vmatprep.mubr.bf16.mxu0 0
        %776 = vmatmul.mubr.bf16.gmra.mrb[0].mxu0 %v738
        %v777 = vpop.f32.mrb[0].mxu0
        %v778 = vadd.f32 0.0, %v777
        %v779 = vpop.f32.mrb[0].mxu0
        %v780 = vpop.f32.mrb[0].mxu0
        %v781 = vpop.f32.mrb[0].mxu0
        %782 = vdwg.mxu0
        %784 = vrot.lane.b32.xlu0 %v478, 96
        %v785 = vpop.permute.xlu0 %784
        %v787 = vsel %vm491, %v478, 0
        %v790 = vsel %vm491, %v785, 0
        %792 = vmatprep.subr.bf16.mxu0 0
        %793 = vmatpush1.bf16.xpose.msra.mxu0 %v790
        %794 = vmatprep.subr.bf16.mxu0 0
        %795 = vmatpush1.bf16.xpose.msra.mxu0 0
        %796 = vmatprep.subr.bf16.mxu0 0
        %797 = vmatpush1.bf16.xpose.msra.mxu0 0
        %798 = vmatprep.subr.bf16.mxu0 0
        %799 = vmatpush1.bf16.xpose.msra.mxu0 0
        %800 = vmatprep.subr.bf16.mxu0 0
        %801 = vmatpush1.bf16.xpose.msra.mxu0 0
        %802 = vmatprep.subr.bf16.mxu0 0
        %803 = vmatpush1.bf16.xpose.msra.mxu0 0
        %804 = vmatprep.subr.bf16.mxu0 0
        %805 = vmatpush1.bf16.xpose.msra.mxu0 0
        %806 = vmatprep.subr.bf16.mxu0 0
        %807 = vmatpush1.bf16.xpose.msra.mxu0 0
        %808 = vmatprep.subr.bf16.mxu0 0
        %809 = vmatpush1.bf16.xpose.msra.mxu0 0
        %810 = vmatprep.subr.bf16.mxu0 0
        %811 = vmatpush1.bf16.xpose.msra.mxu0 0
        %812 = vmatprep.subr.bf16.mxu0 0
        %813 = vmatpush1.bf16.xpose.msra.mxu0 0
        %814 = vmatprep.subr.bf16.mxu0 0
        %815 = vmatpush1.bf16.xpose.msra.mxu0 0
        %816 = vmatprep.subr.bf16.mxu0 0
        %817 = vmatpush1.bf16.xpose.msra.mxu0 0
        %818 = vmatprep.subr.bf16.mxu0 0
        %819 = vmatpush1.bf16.xpose.msra.mxu0 0
        %820 = vmatprep.subr.bf16.mxu0 0
        %821 = vmatpush1.bf16.xpose.msra.mxu0 0
        %822 = vmatprep.subr.bf16.mxu0 0
        %823 = vmatpush1.bf16.xpose.msra.mxu0 0
        %824 = vmatprep.mubr.bf16.mxu0 0
        %825 = vmatmul.mubr.bf16.gmra.mrb[0].mxu0 %v787
        %v826 = vpop.f32.mrb[0].mxu0
        %v827 = vadd.f32 0.0, %v826
        %v828 = vpop.f32.mrb[0].mxu0
        %v829 = vpop.f32.mrb[0].mxu0
        %v830 = vpop.f32.mrb[0].mxu0
        %831 = vdwg.mxu0
        %833 = vrot.lane.b32.xlu0 %v479, 96
        %v834 = vpop.permute.xlu0 %833
        %v836 = vsel %vm491, %v479, 0
        %v839 = vsel %vm491, %v834, 0
        %841 = vmatprep.subr.bf16.mxu0 0
        %842 = vmatpush1.bf16.xpose.msra.mxu0 %v839
        %843 = vmatprep.subr.bf16.mxu0 0
        %844 = vmatpush1.bf16.xpose.msra.mxu0 0
        %845 = vmatprep.subr.bf16.mxu0 0
        %846 = vmatpush1.bf16.xpose.msra.mxu0 0
        %847 = vmatprep.subr.bf16.mxu0 0
        %848 = vmatpush1.bf16.xpose.msra.mxu0 0
        %849 = vmatprep.subr.bf16.mxu0 0
        %850 = vmatpush1.bf16.xpose.msra.mxu0 0
        %851 = vmatprep.subr.bf16.mxu0 0
        %852 = vmatpush1.bf16.xpose.msra.mxu0 0
        %853 = vmatprep.subr.bf16.mxu0 0
        %854 = vmatpush1.bf16.xpose.msra.mxu0 0
        %855 = vmatprep.subr.bf16.mxu0 0
        %856 = vmatpush1.bf16.xpose.msra.mxu0 0
        %857 = vmatprep.subr.bf16.mxu0 0
        %858 = vmatpush1.bf16.xpose.msra.mxu0 0
        %859 = vmatprep.subr.bf16.mxu0 0
        %860 = vmatpush1.bf16.xpose.msra.mxu0 0
        %861 = vmatprep.subr.bf16.mxu0 0
        %862 = vmatpush1.bf16.xpose.msra.mxu0 0
        %863 = vmatprep.subr.bf16.mxu0 0
        %864 = vmatpush1.bf16.xpose.msra.mxu0 0
        %865 = vmatprep.subr.bf16.mxu0 0
        %866 = vmatpush1.bf16.xpose.msra.mxu0 0
        %867 = vmatprep.subr.bf16.mxu0 0
        %868 = vmatpush1.bf16.xpose.msra.mxu0 0
        %869 = vmatprep.subr.bf16.mxu0 0
        %870 = vmatpush1.bf16.xpose.msra.mxu0 0
        %871 = vmatprep.subr.bf16.mxu0 0
        %872 = vmatpush1.bf16.xpose.msra.mxu0 0
        %873 = vmatprep.mubr.bf16.mxu0 0
        %874 = vmatmul.mubr.bf16.gmra.mrb[0].mxu0 %v836
        %v875 = vpop.f32.mrb[0].mxu0
        %v876 = vadd.f32 0.0, %v875
        %v877 = vpop.f32.mrb[0].mxu0
        %v878 = vpop.f32.mrb[0].mxu0
        %v879 = vpop.f32.mrb[0].mxu0
        %880 = vdwg.mxu0
        %882 = vrot.lane.b32.xlu0 %v480, 96
        %v883 = vpop.permute.xlu0 %882
        %v885 = vsel %vm491, %v480, 0
        %v888 = vsel %vm491, %v883, 0
        %890 = vmatprep.subr.bf16.mxu0 0
        %891 = vmatpush1.bf16.xpose.msra.mxu0 %v888
        %892 = vmatprep.subr.bf16.mxu0 0
        %893 = vmatpush1.bf16.xpose.msra.mxu0 0
        %894 = vmatprep.subr.bf16.mxu0 0
        %895 = vmatpush1.bf16.xpose.msra.mxu0 0
        %896 = vmatprep.subr.bf16.mxu0 0
        %897 = vmatpush1.bf16.xpose.msra.mxu0 0
        %898 = vmatprep.subr.bf16.mxu0 0
        %899 = vmatpush1.bf16.xpose.msra.mxu0 0
        %900 = vmatprep.subr.bf16.mxu0 0
        %901 = vmatpush1.bf16.xpose.msra.mxu0 0
        %902 = vmatprep.subr.bf16.mxu0 0
        %903 = vmatpush1.bf16.xpose.msra.mxu0 0
        %904 = vmatprep.subr.bf16.mxu0 0
        %905 = vmatpush1.bf16.xpose.msra.mxu0 0
        %906 = vmatprep.subr.bf16.mxu0 0
        %907 = vmatpush1.bf16.xpose.msra.mxu0 0
        %908 = vmatprep.subr.bf16.mxu0 0
        %909 = vmatpush1.bf16.xpose.msra.mxu0 0
        %910 = vmatprep.subr.bf16.mxu0 0
        %911 = vmatpush1.bf16.xpose.msra.mxu0 0
        %912 = vmatprep.subr.bf16.mxu0 0
        %913 = vmatpush1.bf16.xpose.msra.mxu0 0
        %914 = vmatprep.subr.bf16.mxu0 0
        %915 = vmatpush1.bf16.xpose.msra.mxu0 0
        %916 = vmatprep.subr.bf16.mxu0 0
        %917 = vmatpush1.bf16.xpose.msra.mxu0 0
        %918 = vmatprep.subr.bf16.mxu0 0
        %919 = vmatpush1.bf16.xpose.msra.mxu0 0
        %920 = vmatprep.subr.bf16.mxu0 0
        %921 = vmatpush1.bf16.xpose.msra.mxu0 0
        %922 = vmatprep.mubr.bf16.mxu0 0
        %923 = vmatmul.mubr.bf16.gmra.mrb[0].mxu0 %v885
        %v924 = vpop.f32.mrb[0].mxu0
        %v925 = vadd.f32 0.0, %v924
        %v926 = vpop.f32.mrb[0].mxu0
        %v927 = vpop.f32.mrb[0].mxu0
        %v928 = vpop.f32.mrb[0].mxu0
        %929 = vdwg.mxu0
        %931 = vrot.lane.b32.xlu0 %v481, 96
        %v932 = vpop.permute.xlu0 %931
        %v934 = vsel %vm491, %v481, 0
        %v937 = vsel %vm491, %v932, 0
        %939 = vmatprep.subr.bf16.mxu0 0
        %940 = vmatpush1.bf16.xpose.msra.mxu0 %v937
        %941 = vmatprep.subr.bf16.mxu0 0
        %942 = vmatpush1.bf16.xpose.msra.mxu0 0
        %943 = vmatprep.subr.bf16.mxu0 0
        %944 = vmatpush1.bf16.xpose.msra.mxu0 0
        %945 = vmatprep.subr.bf16.mxu0 0
        %946 = vmatpush1.bf16.xpose.msra.mxu0 0
        %947 = vmatprep.subr.bf16.mxu0 0
        %948 = vmatpush1.bf16.xpose.msra.mxu0 0
        %949 = vmatprep.subr.bf16.mxu0 0
        %950 = vmatpush1.bf16.xpose.msra.mxu0 0
        %951 = vmatprep.subr.bf16.mxu0 0
        %952 = vmatpush1.bf16.xpose.msra.mxu0 0
        %953 = vmatprep.subr.bf16.mxu0 0
        %954 = vmatpush1.bf16.xpose.msra.mxu0 0
        %955 = vmatprep.subr.bf16.mxu0 0
        %956 = vmatpush1.bf16.xpose.msra.mxu0 0
        %957 = vmatprep.subr.bf16.mxu0 0
        %958 = vmatpush1.bf16.xpose.msra.mxu0 0
        %959 = vmatprep.subr.bf16.mxu0 0
        %960 = vmatpush1.bf16.xpose.msra.mxu0 0
        %961 = vmatprep.subr.bf16.mxu0 0
        %962 = vmatpush1.bf16.xpose.msra.mxu0 0
        %963 = vmatprep.subr.bf16.mxu0 0
        %964 = vmatpush1.bf16.xpose.msra.mxu0 0
        %965 = vmatprep.subr.bf16.mxu0 0
        %966 = vmatpush1.bf16.xpose.msra.mxu0 0
        %967 = vmatprep.subr.bf16.mxu0 0
        %968 = vmatpush1.bf16.xpose.msra.mxu0 0
        %969 = vmatprep.subr.bf16.mxu0 0
        %970 = vmatpush1.bf16.xpose.msra.mxu0 0
        %971 = vmatprep.mubr.bf16.mxu0 0
        %972 = vmatmul.mubr.bf16.gmra.mrb[0].mxu0 %v934
        %v973 = vpop.f32.mrb[0].mxu0
        %v974 = vadd.f32 0.0, %v973
        %v975 = vpop.f32.mrb[0].mxu0
        %v976 = vpop.f32.mrb[0].mxu0
        %v977 = vpop.f32.mrb[0].mxu0
        %978 = vdwg.mxu0
        %980 = vrot.lane.b32.xlu0 %v482, 96
        %v981 = vpop.permute.xlu0 %980
        %v983 = vsel %vm491, %v482, 0
        %v986 = vsel %vm491, %v981, 0
        %988 = vmatprep.subr.bf16.mxu0 0
        %989 = vmatpush1.bf16.xpose.msra.mxu0 %v986
        %990 = vmatprep.subr.bf16.mxu0 0
        %991 = vmatpush1.bf16.xpose.msra.mxu0 0
        %992 = vmatprep.subr.bf16.mxu0 0
        %993 = vmatpush1.bf16.xpose.msra.mxu0 0
        %994 = vmatprep.subr.bf16.mxu0 0
        %995 = vmatpush1.bf16.xpose.msra.mxu0 0
        %996 = vmatprep.subr.bf16.mxu0 0
        %997 = vmatpush1.bf16.xpose.msra.mxu0 0
        %998 = vmatprep.subr.bf16.mxu0 0
        %999 = vmatpush1.bf16.xpose.msra.mxu0 0
        %1000 = vmatprep.subr.bf16.mxu0 0
        %1001 = vmatpush1.bf16.xpose.msra.mxu0 0
        %1002 = vmatprep.subr.bf16.mxu0 0
        %1003 = vmatpush1.bf16.xpose.msra.mxu0 0
        %1004 = vmatprep.subr.bf16.mxu0 0
        %1005 = vmatpush1.bf16.xpose.msra.mxu0 0
        %1006 = vmatprep.subr.bf16.mxu0 0
        %1007 = vmatpush1.bf16.xpose.msra.mxu0 0
        %1008 = vmatprep.subr.bf16.mxu0 0
        %1009 = vmatpush1.bf16.xpose.msra.mxu0 0
        %1010 = vmatprep.subr.bf16.mxu0 0
        %1011 = vmatpush1.bf16.xpose.msra.mxu0 0
        %1012 = vmatprep.subr.bf16.mxu0 0
        %1013 = vmatpush1.bf16.xpose.msra.mxu0 0
        %1014 = vmatprep.subr.bf16.mxu0 0
        %1015 = vmatpush1.bf16.xpose.msra.mxu0 0
        %1016 = vmatprep.subr.bf16.mxu0 0
        %1017 = vmatpush1.bf16.xpose.msra.mxu0 0
        %1018 = vmatprep.subr.bf16.mxu0 0
        %1019 = vmatpush1.bf16.xpose.msra.mxu0 0
        %1020 = vmatprep.mubr.bf16.mxu0 0
        %1021 = vmatmul.mubr.bf16.gmra.mrb[0].mxu0 %v983
        %v1022 = vpop.f32.mrb[0].mxu0
        %v1023 = vadd.f32 0.0, %v1022
        %v1024 = vpop.f32.mrb[0].mxu0
        %v1025 = vpop.f32.mrb[0].mxu0
        %v1026 = vpop.f32.mrb[0].mxu0
        %1027 = vdwg.mxu0
        %1029 = vrot.lane.b32.xlu0 %v483, 96
        %v1030 = vpop.permute.xlu0 %1029
        %v1032 = vsel %vm491, %v483, 0
        %v1035 = vsel %vm491, %v1030, 0
        %1037 = vmatprep.subr.bf16.mxu0 0
        %1038 = vmatpush1.bf16.xpose.msra.mxu0 %v1035
        %1039 = vmatprep.subr.bf16.mxu0 0
        %1040 = vmatpush1.bf16.xpose.msra.mxu0 0
        %1041 = vmatprep.subr.bf16.mxu0 0
        %1042 = vmatpush1.bf16.xpose.msra.mxu0 0
        %1043 = vmatprep.subr.bf16.mxu0 0
        %1044 = vmatpush1.bf16.xpose.msra.mxu0 0
        %1045 = vmatprep.subr.bf16.mxu0 0
        %1046 = vmatpush1.bf16.xpose.msra.mxu0 0
        %1047 = vmatprep.subr.bf16.mxu0 0
        %1048 = vmatpush1.bf16.xpose.msra.mxu0 0
        %1049 = vmatprep.subr.bf16.mxu0 0
        %1050 = vmatpush1.bf16.xpose.msra.mxu0 0
        %1051 = vmatprep.subr.bf16.mxu0 0
        %1052 = vmatpush1.bf16.xpose.msra.mxu0 0
        %1053 = vmatprep.subr.bf16.mxu0 0
        %1054 = vmatpush1.bf16.xpose.msra.mxu0 0
        %1055 = vmatprep.subr.bf16.mxu0 0
        %1056 = vmatpush1.bf16.xpose.msra.mxu0 0
        %1057 = vmatprep.subr.bf16.mxu0 0
        %1058 = vmatpush1.bf16.xpose.msra.mxu0 0
        %1059 = vmatprep.subr.bf16.mxu0 0
        %1060 = vmatpush1.bf16.xpose.msra.mxu0 0
        %1061 = vmatprep.subr.bf16.mxu0 0
        %1062 = vmatpush1.bf16.xpose.msra.mxu0 0
        %1063 = vmatprep.subr.bf16.mxu0 0
        %1064 = vmatpush1.bf16.xpose.msra.mxu0 0
        %1065 = vmatprep.subr.bf16.mxu0 0
        %1066 = vmatpush1.bf16.xpose.msra.mxu0 0
        %1067 = vmatprep.subr.bf16.mxu0 0
        %1068 = vmatpush1.bf16.xpose.msra.mxu0 0
        %1069 = vmatprep.mubr.bf16.mxu0 0
        %1070 = vmatmul.mubr.bf16.gmra.mrb[0].mxu0 %v1032
        %v1071 = vpop.f32.mrb[0].mxu0
        %v1072 = vadd.f32 0.0, %v1071
        %v1073 = vpop.f32.mrb[0].mxu0
        %v1074 = vpop.f32.mrb[0].mxu0
        %v1075 = vpop.f32.mrb[0].mxu0
        %1076 = vdwg.mxu0
        %1078 = vrot.lane.b32.xlu0 %v484, 96
        %v1079 = vpop.permute.xlu0 %1078
        %v1081 = vsel %vm491, %v484, 0
        %v1084 = vsel %vm491, %v1079, 0
        %1086 = vmatprep.subr.bf16.mxu0 0
        %1087 = vmatpush1.bf16.xpose.msra.mxu0 %v1084
        %1088 = vmatprep.subr.bf16.mxu0 0
        %1089 = vmatpush1.bf16.xpose.msra.mxu0 0
        %1090 = vmatprep.subr.bf16.mxu0 0
        %1091 = vmatpush1.bf16.xpose.msra.mxu0 0
        %1092 = vmatprep.subr.bf16.mxu0 0
        %1093 = vmatpush1.bf16.xpose.msra.mxu0 0
        %1094 = vmatprep.subr.bf16.mxu0 0
        %1095 = vmatpush1.bf16.xpose.msra.mxu0 0
        %1096 = vmatprep.subr.bf16.mxu0 0
        %1097 = vmatpush1.bf16.xpose.msra.mxu0 0
        %1098 = vmatprep.subr.bf16.mxu0 0
        %1099 = vmatpush1.bf16.xpose.msra.mxu0 0
        %1100 = vmatprep.subr.bf16.mxu0 0
        %1101 = vmatpush1.bf16.xpose.msra.mxu0 0
        %1102 = vmatprep.subr.bf16.mxu0 0
        %1103 = vmatpush1.bf16.xpose.msra.mxu0 0
        %1104 = vmatprep.subr.bf16.mxu0 0
        %1105 = vmatpush1.bf16.xpose.msra.mxu0 0
        %1106 = vmatprep.subr.bf16.mxu0 0
        %1107 = vmatpush1.bf16.xpose.msra.mxu0 0
        %1108 = vmatprep.subr.bf16.mxu0 0
        %1109 = vmatpush1.bf16.xpose.msra.mxu0 0
        %1110 = vmatprep.subr.bf16.mxu0 0
        %1111 = vmatpush1.bf16.xpose.msra.mxu0 0
        %1112 = vmatprep.subr.bf16.mxu0 0
        %1113 = vmatpush1.bf16.xpose.msra.mxu0 0
        %1114 = vmatprep.subr.bf16.mxu0 0
        %1115 = vmatpush1.bf16.xpose.msra.mxu0 0
        %1116 = vmatprep.subr.bf16.mxu0 0
        %1117 = vmatpush1.bf16.xpose.msra.mxu0 0
        %1118 = vmatprep.mubr.bf16.mxu0 0
        %1119 = vmatmul.mubr.bf16.gmra.mrb[0].mxu0 %v1081
        %v1120 = vpop.f32.mrb[0].mxu0
        %v1121 = vadd.f32 0.0, %v1120
        %v1122 = vpop.f32.mrb[0].mxu0
        %v1123 = vpop.f32.mrb[0].mxu0
        %v1124 = vpop.f32.mrb[0].mxu0
        %1125 = vdwg.mxu0
        %1127 = vrot.lane.b32.xlu0 %v485, 96
        %v1128 = vpop.permute.xlu0 %1127
        %v1130 = vsel %vm491, %v485, 0
        %v1133 = vsel %vm491, %v1128, 0
        %1135 = vmatprep.subr.bf16.mxu0 0
        %1136 = vmatpush1.bf16.xpose.msra.mxu0 %v1133
        %1137 = vmatprep.subr.bf16.mxu0 0
        %1138 = vmatpush1.bf16.xpose.msra.mxu0 0
        %1139 = vmatprep.subr.bf16.mxu0 0
        %1140 = vmatpush1.bf16.xpose.msra.mxu0 0
        %1141 = vmatprep.subr.bf16.mxu0 0
        %1142 = vmatpush1.bf16.xpose.msra.mxu0 0
        %1143 = vmatprep.subr.bf16.mxu0 0
        %1144 = vmatpush1.bf16.xpose.msra.mxu0 0
        %1145 = vmatprep.subr.bf16.mxu0 0
        %1146 = vmatpush1.bf16.xpose.msra.mxu0 0
        %1147 = vmatprep.subr.bf16.mxu0 0
        %1148 = vmatpush1.bf16.xpose.msra.mxu0 0
        %1149 = vmatprep.subr.bf16.mxu0 0
        %1150 = vmatpush1.bf16.xpose.msra.mxu0 0
        %1151 = vmatprep.subr.bf16.mxu0 0
        %1152 = vmatpush1.bf16.xpose.msra.mxu0 0
        %1153 = vmatprep.subr.bf16.mxu0 0
        %1154 = vmatpush1.bf16.xpose.msra.mxu0 0
        %1155 = vmatprep.subr.bf16.mxu0 0
        %1156 = vmatpush1.bf16.xpose.msra.mxu0 0
        %1157 = vmatprep.subr.bf16.mxu0 0
        %1158 = vmatpush1.bf16.xpose.msra.mxu0 0
        %1159 = vmatprep.subr.bf16.mxu0 0
        %1160 = vmatpush1.bf16.xpose.msra.mxu0 0
        %1161 = vmatprep.subr.bf16.mxu0 0
        %1162 = vmatpush1.bf16.xpose.msra.mxu0 0
        %1163 = vmatprep.subr.bf16.mxu0 0
        %1164 = vmatpush1.bf16.xpose.msra.mxu0 0
        %1165 = vmatprep.subr.bf16.mxu0 0
        %1166 = vmatpush1.bf16.xpose.msra.mxu0 0
        %1167 = vmatprep.mubr.bf16.mxu0 0
        %1168 = vmatmul.mubr.bf16.gmra.mrb[0].mxu0 %v1130
        %v1169 = vpop.f32.mrb[0].mxu0
        %v1170 = vadd.f32 0.0, %v1169
        %v1171 = vpop.f32.mrb[0].mxu0
        %v1172 = vpop.f32.mrb[0].mxu0
        %v1173 = vpop.f32.mrb[0].mxu0
        %1174 = vdwg.mxu0
        %1176 = vrot.lane.b32.xlu0 %v486, 96
        %v1177 = vpop.permute.xlu0 %1176
        %v1179 = vsel %vm491, %v486, 0
        %v1182 = vsel %vm491, %v1177, 0
        %1184 = vmatprep.subr.bf16.mxu0 0
        %1185 = vmatpush1.bf16.xpose.msra.mxu0 %v1182
        %1186 = vmatprep.subr.bf16.mxu0 0
        %1187 = vmatpush1.bf16.xpose.msra.mxu0 0
        %1188 = vmatprep.subr.bf16.mxu0 0
        %1189 = vmatpush1.bf16.xpose.msra.mxu0 0
        %1190 = vmatprep.subr.bf16.mxu0 0
        %1191 = vmatpush1.bf16.xpose.msra.mxu0 0
        %1192 = vmatprep.subr.bf16.mxu0 0
        %1193 = vmatpush1.bf16.xpose.msra.mxu0 0
        %1194 = vmatprep.subr.bf16.mxu0 0
        %1195 = vmatpush1.bf16.xpose.msra.mxu0 0
        %1196 = vmatprep.subr.bf16.mxu0 0
        %1197 = vmatpush1.bf16.xpose.msra.mxu0 0
        %1198 = vmatprep.subr.bf16.mxu0 0
        %1199 = vmatpush1.bf16.xpose.msra.mxu0 0
        %1200 = vmatprep.subr.bf16.mxu0 0
        %1201 = vmatpush1.bf16.xpose.msra.mxu0 0
        %1202 = vmatprep.subr.bf16.mxu0 0
        %1203 = vmatpush1.bf16.xpose.msra.mxu0 0
        %1204 = vmatprep.subr.bf16.mxu0 0
        %1205 = vmatpush1.bf16.xpose.msra.mxu0 0
        %1206 = vmatprep.subr.bf16.mxu0 0
        %1207 = vmatpush1.bf16.xpose.msra.mxu0 0
        %1208 = vmatprep.subr.bf16.mxu0 0
        %1209 = vmatpush1.bf16.xpose.msra.mxu0 0
        %1210 = vmatprep.subr.bf16.mxu0 0
        %1211 = vmatpush1.bf16.xpose.msra.mxu0 0
        %1212 = vmatprep.subr.bf16.mxu0 0
        %1213 = vmatpush1.bf16.xpose.msra.mxu0 0
        %1214 = vmatprep.subr.bf16.mxu0 0
        %1215 = vmatpush1.bf16.xpose.msra.mxu0 0
        %1216 = vmatprep.mubr.bf16.mxu0 0
        %1217 = vmatmul.mubr.bf16.gmra.mrb[0].mxu0 %v1179
        %v1218 = vpop.f32.mrb[0].mxu0
        %v1219 = vadd.f32 0.0, %v1218
        %v1220 = vpop.f32.mrb[0].mxu0
        %v1221 = vpop.f32.mrb[0].mxu0
        %v1222 = vpop.f32.mrb[0].mxu0
        %1223 = vdwg.mxu0
        %1225 = vrot.lane.b32.xlu0 %v487, 96
        %v1226 = vpop.permute.xlu0 %1225
        %v1228 = vsel %vm491, %v487, 0
        %v1231 = vsel %vm491, %v1226, 0
        %1233 = vmatprep.subr.bf16.mxu0 0
        %1234 = vmatpush1.bf16.xpose.msra.mxu0 %v1231
        %1235 = vmatprep.subr.bf16.mxu0 0
        %1236 = vmatpush1.bf16.xpose.msra.mxu0 0
        %1237 = vmatprep.subr.bf16.mxu0 0
        %1238 = vmatpush1.bf16.xpose.msra.mxu0 0
        %1239 = vmatprep.subr.bf16.mxu0 0
        %1240 = vmatpush1.bf16.xpose.msra.mxu0 0
        %1241 = vmatprep.subr.bf16.mxu0 0
        %1242 = vmatpush1.bf16.xpose.msra.mxu0 0
        %1243 = vmatprep.subr.bf16.mxu0 0
        %1244 = vmatpush1.bf16.xpose.msra.mxu0 0
        %1245 = vmatprep.subr.bf16.mxu0 0
        %1246 = vmatpush1.bf16.xpose.msra.mxu0 0
        %1247 = vmatprep.subr.bf16.mxu0 0
        %1248 = vmatpush1.bf16.xpose.msra.mxu0 0
        %1249 = vmatprep.subr.bf16.mxu0 0
        %1250 = vmatpush1.bf16.xpose.msra.mxu0 0
        %1251 = vmatprep.subr.bf16.mxu0 0
        %1252 = vmatpush1.bf16.xpose.msra.mxu0 0
        %1253 = vmatprep.subr.bf16.mxu0 0
        %1254 = vmatpush1.bf16.xpose.msra.mxu0 0
        %1255 = vmatprep.subr.bf16.mxu0 0
        %1256 = vmatpush1.bf16.xpose.msra.mxu0 0
        %1257 = vmatprep.subr.bf16.mxu0 0
        %1258 = vmatpush1.bf16.xpose.msra.mxu0 0
        %1259 = vmatprep.subr.bf16.mxu0 0
        %1260 = vmatpush1.bf16.xpose.msra.mxu0 0
        %1261 = vmatprep.subr.bf16.mxu0 0
        %1262 = vmatpush1.bf16.xpose.msra.mxu0 0
        %1263 = vmatprep.subr.bf16.mxu0 0
        %1264 = vmatpush1.bf16.xpose.msra.mxu0 0
        %1265 = vmatprep.mubr.bf16.mxu0 0
        %1266 = vmatmul.mubr.bf16.gmra.mrb[0].mxu0 %v1228
        %v1267 = vpop.f32.mrb[0].mxu0
        %v1268 = vadd.f32 0.0, %v1267
        %v1269 = vpop.f32.mrb[0].mxu0
        %v1270 = vpop.f32.mrb[0].mxu0
        %v1271 = vpop.f32.mrb[0].mxu0
        %1272 = vdwg.mxu0
        %v1273 = vsel %vm491, %v533, -inf
        %1274 = vmax.xlane.f32.xlu0 %v1273
        %v1275 = vpop.xlane.xlu0 %1274
        %v1276 = vsel %vm491, %v582, -inf
        %1277 = vmax.xlane.f32.xlu0 %v1276
        %v1278 = vpop.xlane.xlu0 %1277
        %v1279 = vsel %vm491, %v631, -inf
        %1280 = vmax.xlane.f32.xlu0 %v1279
        %v1281 = vpop.xlane.xlu0 %1280
        %v1282 = vsel %vm491, %v680, -inf
        %1283 = vmax.xlane.f32.xlu0 %v1282
        %v1284 = vpop.xlane.xlu0 %1283
        %v1285 = vsel %vm491, %v729, -inf
        %1286 = vmax.xlane.f32.xlu0 %v1285
        %v1287 = vpop.xlane.xlu0 %1286
        %v1288 = vsel %vm491, %v778, -inf
        %1289 = vmax.xlane.f32.xlu0 %v1288
        %v1290 = vpop.xlane.xlu0 %1289
        %v1291 = vsel %vm491, %v827, -inf
        %1292 = vmax.xlane.f32.xlu0 %v1291
        %v1293 = vpop.xlane.xlu0 %1292
        %v1294 = vsel %vm491, %v876, -inf
        %1295 = vmax.xlane.f32.xlu0 %v1294
        %v1296 = vpop.xlane.xlu0 %1295
        %v1297 = vsel %vm491, %v925, -inf
        %1298 = vmax.xlane.f32.xlu0 %v1297
        %v1299 = vpop.xlane.xlu0 %1298
        %v1300 = vsel %vm491, %v974, -inf
        %1301 = vmax.xlane.f32.xlu0 %v1300
        %v1302 = vpop.xlane.xlu0 %1301
        %v1303 = vsel %vm491, %v1023, -inf
        %1304 = vmax.xlane.f32.xlu0 %v1303
        %v1305 = vpop.xlane.xlu0 %1304
        %v1306 = vsel %vm491, %v1072, -inf
        %1307 = vmax.xlane.f32.xlu0 %v1306
        %v1308 = vpop.xlane.xlu0 %1307
        %v1309 = vsel %vm491, %v1121, -inf
        %1310 = vmax.xlane.f32.xlu0 %v1309
        %v1311 = vpop.xlane.xlu0 %1310
        %v1312 = vsel %vm491, %v1170, -inf
        %1313 = vmax.xlane.f32.xlu0 %v1312
        %v1314 = vpop.xlane.xlu0 %1313
        %v1315 = vsel %vm491, %v1219, -inf
        %1316 = vmax.xlane.f32.xlu0 %v1315
        %v1317 = vpop.xlane.xlu0 %1316
        %v1318 = vsel %vm491, %v1268, -inf
        %1319 = vmax.xlane.f32.xlu0 %v1318
        %v1320 = vpop.xlane.xlu0 %1319
        %v1321 = vsub.f32 %v533, %v1275
        %v1322 = vsub.f32 %v582, %v1278
        %v1323 = vsub.f32 %v631, %v1281
        %v1324 = vsub.f32 %v680, %v1284
        %v1325 = vsub.f32 %v729, %v1287
        %v1326 = vsub.f32 %v778, %v1290
        %v1327 = vsub.f32 %v827, %v1293
        %v1328 = vsub.f32 %v876, %v1296
        %v1329 = vsub.f32 %v925, %v1299
        %v1330 = vsub.f32 %v974, %v1302
        %v1331 = vsub.f32 %v1023, %v1305
        %v1332 = vsub.f32 %v1072, %v1308
        %v1333 = vsub.f32 %v1121, %v1311
        %v1334 = vsub.f32 %v1170, %v1314
        %v1335 = vsub.f32 %v1219, %v1317
        %v1336 = vsub.f32 %v1268, %v1320
        %v1337 = vmul.f32 %v1321, 1.442695
        %v1338 = vpow.pop %v1337
        %v1339 = vmul.f32 %v1322, 1.442695
        %v1340 = vpow.pop %v1339
        %v1341 = vmul.f32 %v1323, 1.442695
        %v1342 = vpow.pop %v1341
        %v1343 = vmul.f32 %v1324, 1.442695
        %v1344 = vpow.pop %v1343
        %v1345 = vmul.f32 %v1325, 1.442695
        %v1346 = vpow.pop %v1345
        %v1347 = vmul.f32 %v1326, 1.442695
        %v1348 = vpow.pop %v1347
        %v1349 = vmul.f32 %v1327, 1.442695
        %v1350 = vpow.pop %v1349
        %v1351 = vmul.f32 %v1328, 1.442695
        %v1352 = vpow.pop %v1351
        %v1353 = vmul.f32 %v1329, 1.442695
        %v1354 = vpow.pop %v1353
        %v1355 = vmul.f32 %v1330, 1.442695
        %v1356 = vpow.pop %v1355
        %v1357 = vmul.f32 %v1331, 1.442695
        %v1358 = vpow.pop %v1357
        %v1359 = vmul.f32 %v1332, 1.442695
        %v1360 = vpow.pop %v1359
        %v1361 = vmul.f32 %v1333, 1.442695
        %v1362 = vpow.pop %v1361
        %v1363 = vmul.f32 %v1334, 1.442695
        %v1364 = vpow.pop %v1363
        %v1365 = vmul.f32 %v1335, 1.442695
        %v1366 = vpow.pop %v1365
        %v1367 = vmul.f32 %v1336, 1.442695
        %v1368 = vpow.pop %v1367
        %v1369 = vsel %vm491, %v1338, 0.0
        %1370 = vadd.xlane.f32.xlu0 %v1369
        %v1371 = vpop.xlane.xlu0 %1370
        %v1372 = vsel %vm491, %v1340, 0.0
        %1373 = vadd.xlane.f32.xlu0 %v1372
        %v1374 = vpop.xlane.xlu0 %1373
        %v1375 = vsel %vm491, %v1342, 0.0
        %1376 = vadd.xlane.f32.xlu0 %v1375
        %v1377 = vpop.xlane.xlu0 %1376
        %v1378 = vsel %vm491, %v1344, 0.0
        %1379 = vadd.xlane.f32.xlu0 %v1378
        %v1380 = vpop.xlane.xlu0 %1379
        %v1381 = vsel %vm491, %v1346, 0.0
        %1382 = vadd.xlane.f32.xlu0 %v1381
        %v1383 = vpop.xlane.xlu0 %1382
        %v1384 = vsel %vm491, %v1348, 0.0
        %1385 = vadd.xlane.f32.xlu0 %v1384
        %v1386 = vpop.xlane.xlu0 %1385
        %v1387 = vsel %vm491, %v1350, 0.0
        %1388 = vadd.xlane.f32.xlu0 %v1387
        %v1389 = vpop.xlane.xlu0 %1388
        %v1390 = vsel %vm491, %v1352, 0.0
        %1391 = vadd.xlane.f32.xlu0 %v1390
        %v1392 = vpop.xlane.xlu0 %1391
        %v1393 = vsel %vm491, %v1354, 0.0
        %1394 = vadd.xlane.f32.xlu0 %v1393
        %v1395 = vpop.xlane.xlu0 %1394
        %v1396 = vsel %vm491, %v1356, 0.0
        %1397 = vadd.xlane.f32.xlu0 %v1396
        %v1398 = vpop.xlane.xlu0 %1397
        %v1399 = vsel %vm491, %v1358, 0.0
        %1400 = vadd.xlane.f32.xlu0 %v1399
        %v1401 = vpop.xlane.xlu0 %1400
        %v1402 = vsel %vm491, %v1360, 0.0
        %1403 = vadd.xlane.f32.xlu0 %v1402
        %v1404 = vpop.xlane.xlu0 %1403
        %v1405 = vsel %vm491, %v1362, 0.0
        %1406 = vadd.xlane.f32.xlu0 %v1405
        %v1407 = vpop.xlane.xlu0 %1406
        %v1408 = vsel %vm491, %v1364, 0.0
        %1409 = vadd.xlane.f32.xlu0 %v1408
        %v1410 = vpop.xlane.xlu0 %1409
        %v1411 = vsel %vm491, %v1366, 0.0
        %1412 = vadd.xlane.f32.xlu0 %v1411
        %v1413 = vpop.xlane.xlu0 %1412
        %v1414 = vsel %vm491, %v1368, 0.0
        %1415 = vadd.xlane.f32.xlu0 %v1414
        %v1416 = vpop.xlane.xlu0 %1415
        %v1417 = vrcp.pop %v1371
        %v1418 = vmul.f32 %v1338, %v1417
        %v1419 = vrcp.pop %v1374
        %v1420 = vmul.f32 %v1340, %v1419
        %v1421 = vrcp.pop %v1377
        %v1422 = vmul.f32 %v1342, %v1421
        %v1423 = vrcp.pop %v1380
        %v1424 = vmul.f32 %v1344, %v1423
        %v1425 = vrcp.pop %v1383
        %v1426 = vmul.f32 %v1346, %v1425
        %v1427 = vrcp.pop %v1386
        %v1428 = vmul.f32 %v1348, %v1427
        %v1429 = vrcp.pop %v1389
        %v1430 = vmul.f32 %v1350, %v1429
        %v1431 = vrcp.pop %v1392
        %v1432 = vmul.f32 %v1352, %v1431
        %v1433 = vrcp.pop %v1395
        %v1434 = vmul.f32 %v1354, %v1433
        %v1435 = vrcp.pop %v1398
        %v1436 = vmul.f32 %v1356, %v1435
        %v1437 = vrcp.pop %v1401
        %v1438 = vmul.f32 %v1358, %v1437
        %v1439 = vrcp.pop %v1404
        %v1440 = vmul.f32 %v1360, %v1439
        %v1441 = vrcp.pop %v1407
        %v1442 = vmul.f32 %v1362, %v1441
        %v1443 = vrcp.pop %v1410
        %v1444 = vmul.f32 %v1364, %v1443
        %v1445 = vrcp.pop %v1413
        %v1446 = vmul.f32 %v1366, %v1445
        %v1447 = vrcp.pop %v1416
        %v1448 = vmul.f32 %v1368, %v1447
        %v1449 = vpack.c.bf16 %v1418, %v1418
        %v1450 = vpack.c.bf16 %v1420, %v1420
        %v1451 = vpack.c.bf16 %v1422, %v1422
        %v1452 = vpack.c.bf16 %v1424, %v1424
        %v1453 = vpack.c.bf16 %v1426, %v1426
        %v1454 = vpack.c.bf16 %v1428, %v1428
        %v1455 = vpack.c.bf16 %v1430, %v1430
        %v1456 = vpack.c.bf16 %v1432, %v1432
        %v1457 = vpack.c.bf16 %v1434, %v1434
        %v1458 = vpack.c.bf16 %v1436, %v1436
        %v1459 = vpack.c.bf16 %v1438, %v1438
        %v1460 = vpack.c.bf16 %v1440, %v1440
        %v1461 = vpack.c.bf16 %v1442, %v1442
        %v1462 = vpack.c.bf16 %v1444, %v1444
        %v1463 = vpack.c.bf16 %v1446, %v1446
        %v1464 = vpack.c.bf16 %v1448, %v1448
        %1465 = vrot.lane.b32.xlu0 %v472, 64
        %v1466 = vpop.permute.xlu0 %1465
        %v1468 = vsel %vm491, %v1449, 0
        %vm1470 = vcmask 1043456
        %v1472 = vsel %vm1470, %v1466, 0
        %1474 = vmatprep.subr.bf16.mxu0 0
        %1475 = vmatpush1.bf16.msra.mxu0 %v1472
        %1476 = vmatprep.subr.bf16.mxu0 0
        %1477 = vmatpush1.bf16.msra.mxu0 0
        %1478 = vmatprep.subr.bf16.mxu0 0
        %1479 = vmatpush1.bf16.msra.mxu0 0
        %1480 = vmatprep.subr.bf16.mxu0 0
        %1481 = vmatpush1.bf16.msra.mxu0 0
        %1482 = vmatprep.subr.bf16.mxu0 0
        %1483 = vmatpush1.bf16.msra.mxu0 0
        %1484 = vmatprep.subr.bf16.mxu0 0
        %1485 = vmatpush1.bf16.msra.mxu0 0
        %1486 = vmatprep.subr.bf16.mxu0 0
        %1487 = vmatpush1.bf16.msra.mxu0 0
        %1488 = vmatprep.subr.bf16.mxu0 0
        %1489 = vmatpush1.bf16.msra.mxu0 0
        %1490 = vmatprep.subr.bf16.mxu0 0
        %1491 = vmatpush1.bf16.msra.mxu0 0
        %1492 = vmatprep.subr.bf16.mxu0 0
        %1493 = vmatpush1.bf16.msra.mxu0 0
        %1494 = vmatprep.subr.bf16.mxu0 0
        %1495 = vmatpush1.bf16.msra.mxu0 0
        %1496 = vmatprep.subr.bf16.mxu0 0
        %1497 = vmatpush1.bf16.msra.mxu0 0
        %1498 = vmatprep.subr.bf16.mxu0 0
        %1499 = vmatpush1.bf16.msra.mxu0 0
        %1500 = vmatprep.subr.bf16.mxu0 0
        %1501 = vmatpush1.bf16.msra.mxu0 0
        %1502 = vmatprep.subr.bf16.mxu0 0
        %1503 = vmatpush1.bf16.msra.mxu0 0
        %1504 = vmatprep.subr.bf16.mxu0 0
        %1505 = vmatpush1.bf16.msra.mxu0 0
        %1506 = vmatprep.mubr.bf16.mxu0 0
        %1507 = vmatmul.mubr.bf16.gmra.mrb[0].mxu0 %v1468
        %v1508 = vpop.f32.mrb[0].mxu0
        %v1509 = vadd.f32 0.0, %v1508
        %v1510 = vpop.f32.mrb[0].mxu0
        %v1511 = vpop.f32.mrb[0].mxu0
        %v1512 = vpop.f32.mrb[0].mxu0
        %1513 = vdwg.mxu0
        %1514 = vrot.lane.b32.xlu0 %v473, 64
        %v1515 = vpop.permute.xlu0 %1514
        %v1517 = vsel %vm491, %v1450, 0
        %v1520 = vsel %vm1470, %v1515, 0
        %1522 = vmatprep.subr.bf16.mxu0 0
        %1523 = vmatpush1.bf16.msra.mxu0 %v1520
        %1524 = vmatprep.subr.bf16.mxu0 0
        %1525 = vmatpush1.bf16.msra.mxu0 0
        %1526 = vmatprep.subr.bf16.mxu0 0
        %1527 = vmatpush1.bf16.msra.mxu0 0
        %1528 = vmatprep.subr.bf16.mxu0 0
        %1529 = vmatpush1.bf16.msra.mxu0 0
        %1530 = vmatprep.subr.bf16.mxu0 0
        %1531 = vmatpush1.bf16.msra.mxu0 0
        %1532 = vmatprep.subr.bf16.mxu0 0
        %1533 = vmatpush1.bf16.msra.mxu0 0
        %1534 = vmatprep.subr.bf16.mxu0 0
        %1535 = vmatpush1.bf16.msra.mxu0 0
        %1536 = vmatprep.subr.bf16.mxu0 0
        %1537 = vmatpush1.bf16.msra.mxu0 0
        %1538 = vmatprep.subr.bf16.mxu0 0
        %1539 = vmatpush1.bf16.msra.mxu0 0
        %1540 = vmatprep.subr.bf16.mxu0 0
        %1541 = vmatpush1.bf16.msra.mxu0 0
        %1542 = vmatprep.subr.bf16.mxu0 0
        %1543 = vmatpush1.bf16.msra.mxu0 0
        %1544 = vmatprep.subr.bf16.mxu0 0
        %1545 = vmatpush1.bf16.msra.mxu0 0
        %1546 = vmatprep.subr.bf16.mxu0 0
        %1547 = vmatpush1.bf16.msra.mxu0 0
        %1548 = vmatprep.subr.bf16.mxu0 0
        %1549 = vmatpush1.bf16.msra.mxu0 0
        %1550 = vmatprep.subr.bf16.mxu0 0
        %1551 = vmatpush1.bf16.msra.mxu0 0
        %1552 = vmatprep.subr.bf16.mxu0 0
        %1553 = vmatpush1.bf16.msra.mxu0 0
        %1554 = vmatprep.mubr.bf16.mxu0 0
        %1555 = vmatmul.mubr.bf16.gmra.mrb[0].mxu0 %v1517
        %v1556 = vpop.f32.mrb[0].mxu0
        %v1557 = vadd.f32 0.0, %v1556
        %v1558 = vpop.f32.mrb[0].mxu0
        %v1559 = vpop.f32.mrb[0].mxu0
        %v1560 = vpop.f32.mrb[0].mxu0
        %1561 = vdwg.mxu0
        %1562 = vrot.lane.b32.xlu0 %v474, 64
        %v1563 = vpop.permute.xlu0 %1562
        %v1565 = vsel %vm491, %v1451, 0
        %v1568 = vsel %vm1470, %v1563, 0
        %1570 = vmatprep.subr.bf16.mxu0 0
        %1571 = vmatpush1.bf16.msra.mxu0 %v1568
        %1572 = vmatprep.subr.bf16.mxu0 0
        %1573 = vmatpush1.bf16.msra.mxu0 0
        %1574 = vmatprep.subr.bf16.mxu0 0
        %1575 = vmatpush1.bf16.msra.mxu0 0
        %1576 = vmatprep.subr.bf16.mxu0 0
        %1577 = vmatpush1.bf16.msra.mxu0 0
        %1578 = vmatprep.subr.bf16.mxu0 0
        %1579 = vmatpush1.bf16.msra.mxu0 0
        %1580 = vmatprep.subr.bf16.mxu0 0
        %1581 = vmatpush1.bf16.msra.mxu0 0
        %1582 = vmatprep.subr.bf16.mxu0 0
        %1583 = vmatpush1.bf16.msra.mxu0 0
        %1584 = vmatprep.subr.bf16.mxu0 0
        %1585 = vmatpush1.bf16.msra.mxu0 0
        %1586 = vmatprep.subr.bf16.mxu0 0
        %1587 = vmatpush1.bf16.msra.mxu0 0
        %1588 = vmatprep.subr.bf16.mxu0 0
        %1589 = vmatpush1.bf16.msra.mxu0 0
        %1590 = vmatprep.subr.bf16.mxu0 0
        %1591 = vmatpush1.bf16.msra.mxu0 0
        %1592 = vmatprep.subr.bf16.mxu0 0
        %1593 = vmatpush1.bf16.msra.mxu0 0
        %1594 = vmatprep.subr.bf16.mxu0 0
        %1595 = vmatpush1.bf16.msra.mxu0 0
        %1596 = vmatprep.subr.bf16.mxu0 0
        %1597 = vmatpush1.bf16.msra.mxu0 0
        %1598 = vmatprep.subr.bf16.mxu0 0
        %1599 = vmatpush1.bf16.msra.mxu0 0
        %1600 = vmatprep.subr.bf16.mxu0 0
        %1601 = vmatpush1.bf16.msra.mxu0 0
        %1602 = vmatprep.mubr.bf16.mxu0 0
        %1603 = vmatmul.mubr.bf16.gmra.mrb[0].mxu0 %v1565
        %v1604 = vpop.f32.mrb[0].mxu0
        %v1605 = vadd.f32 0.0, %v1604
        %v1606 = vpop.f32.mrb[0].mxu0
        %v1607 = vpop.f32.mrb[0].mxu0
        %v1608 = vpop.f32.mrb[0].mxu0
        %1609 = vdwg.mxu0
        %1610 = vrot.lane.b32.xlu0 %v475, 64
        %v1611 = vpop.permute.xlu0 %1610
        %v1613 = vsel %vm491, %v1452, 0
        %v1616 = vsel %vm1470, %v1611, 0
        %1618 = vmatprep.subr.bf16.mxu0 0
        %1619 = vmatpush1.bf16.msra.mxu0 %v1616
        %1620 = vmatprep.subr.bf16.mxu0 0
        %1621 = vmatpush1.bf16.msra.mxu0 0
        %1622 = vmatprep.subr.bf16.mxu0 0
        %1623 = vmatpush1.bf16.msra.mxu0 0
        %1624 = vmatprep.subr.bf16.mxu0 0
        %1625 = vmatpush1.bf16.msra.mxu0 0
        %1626 = vmatprep.subr.bf16.mxu0 0
        %1627 = vmatpush1.bf16.msra.mxu0 0
        %1628 = vmatprep.subr.bf16.mxu0 0
        %1629 = vmatpush1.bf16.msra.mxu0 0
        %1630 = vmatprep.subr.bf16.mxu0 0
        %1631 = vmatpush1.bf16.msra.mxu0 0
        %1632 = vmatprep.subr.bf16.mxu0 0
        %1633 = vmatpush1.bf16.msra.mxu0 0
        %1634 = vmatprep.subr.bf16.mxu0 0
        %1635 = vmatpush1.bf16.msra.mxu0 0
        %1636 = vmatprep.subr.bf16.mxu0 0
        %1637 = vmatpush1.bf16.msra.mxu0 0
        %1638 = vmatprep.subr.bf16.mxu0 0
        %1639 = vmatpush1.bf16.msra.mxu0 0
        %1640 = vmatprep.subr.bf16.mxu0 0
        %1641 = vmatpush1.bf16.msra.mxu0 0
        %1642 = vmatprep.subr.bf16.mxu0 0
        %1643 = vmatpush1.bf16.msra.mxu0 0
        %1644 = vmatprep.subr.bf16.mxu0 0
        %1645 = vmatpush1.bf16.msra.mxu0 0
        %1646 = vmatprep.subr.bf16.mxu0 0
        %1647 = vmatpush1.bf16.msra.mxu0 0
        %1648 = vmatprep.subr.bf16.mxu0 0
        %1649 = vmatpush1.bf16.msra.mxu0 0
        %1650 = vmatprep.mubr.bf16.mxu0 0
        %1651 = vmatmul.mubr.bf16.gmra.mrb[0].mxu0 %v1613
        %v1652 = vpop.f32.mrb[0].mxu0
        %v1653 = vadd.f32 0.0, %v1652
        %v1654 = vpop.f32.mrb[0].mxu0
        %v1655 = vpop.f32.mrb[0].mxu0
        %v1656 = vpop.f32.mrb[0].mxu0
        %1657 = vdwg.mxu0
        %1658 = vrot.lane.b32.xlu0 %v476, 64
        %v1659 = vpop.permute.xlu0 %1658
        %v1661 = vsel %vm491, %v1453, 0
        %v1664 = vsel %vm1470, %v1659, 0
        %1666 = vmatprep.subr.bf16.mxu0 0
        %1667 = vmatpush1.bf16.msra.mxu0 %v1664
        %1668 = vmatprep.subr.bf16.mxu0 0
        %1669 = vmatpush1.bf16.msra.mxu0 0
        %1670 = vmatprep.subr.bf16.mxu0 0
        %1671 = vmatpush1.bf16.msra.mxu0 0
        %1672 = vmatprep.subr.bf16.mxu0 0
        %1673 = vmatpush1.bf16.msra.mxu0 0
        %1674 = vmatprep.subr.bf16.mxu0 0
        %1675 = vmatpush1.bf16.msra.mxu0 0
        %1676 = vmatprep.subr.bf16.mxu0 0
        %1677 = vmatpush1.bf16.msra.mxu0 0
        %1678 = vmatprep.subr.bf16.mxu0 0
        %1679 = vmatpush1.bf16.msra.mxu0 0
        %1680 = vmatprep.subr.bf16.mxu0 0
        %1681 = vmatpush1.bf16.msra.mxu0 0
        %1682 = vmatprep.subr.bf16.mxu0 0
        %1683 = vmatpush1.bf16.msra.mxu0 0
        %1684 = vmatprep.subr.bf16.mxu0 0
        %1685 = vmatpush1.bf16.msra.mxu0 0
        %1686 = vmatprep.subr.bf16.mxu0 0
        %1687 = vmatpush1.bf16.msra.mxu0 0
        %1688 = vmatprep.subr.bf16.mxu0 0
        %1689 = vmatpush1.bf16.msra.mxu0 0
        %1690 = vmatprep.subr.bf16.mxu0 0
        %1691 = vmatpush1.bf16.msra.mxu0 0
        %1692 = vmatprep.subr.bf16.mxu0 0
        %1693 = vmatpush1.bf16.msra.mxu0 0
        %1694 = vmatprep.subr.bf16.mxu0 0
        %1695 = vmatpush1.bf16.msra.mxu0 0
        %1696 = vmatprep.subr.bf16.mxu0 0
        %1697 = vmatpush1.bf16.msra.mxu0 0
        %1698 = vmatprep.mubr.bf16.mxu0 0
        %1699 = vmatmul.mubr.bf16.gmra.mrb[0].mxu0 %v1661
        %v1700 = vpop.f32.mrb[0].mxu0
        %v1701 = vadd.f32 0.0, %v1700
        %v1702 = vpop.f32.mrb[0].mxu0
        %v1703 = vpop.f32.mrb[0].mxu0
        %v1704 = vpop.f32.mrb[0].mxu0
        %1705 = vdwg.mxu0
        %1706 = vrot.lane.b32.xlu0 %v477, 64
        %v1707 = vpop.permute.xlu0 %1706
        %v1709 = vsel %vm491, %v1454, 0
        %v1712 = vsel %vm1470, %v1707, 0
        %1714 = vmatprep.subr.bf16.mxu0 0
        %1715 = vmatpush1.bf16.msra.mxu0 %v1712
        %1716 = vmatprep.subr.bf16.mxu0 0
        %1717 = vmatpush1.bf16.msra.mxu0 0
        %1718 = vmatprep.subr.bf16.mxu0 0
        %1719 = vmatpush1.bf16.msra.mxu0 0
        %1720 = vmatprep.subr.bf16.mxu0 0
        %1721 = vmatpush1.bf16.msra.mxu0 0
        %1722 = vmatprep.subr.bf16.mxu0 0
        %1723 = vmatpush1.bf16.msra.mxu0 0
        %1724 = vmatprep.subr.bf16.mxu0 0
        %1725 = vmatpush1.bf16.msra.mxu0 0
        %1726 = vmatprep.subr.bf16.mxu0 0
        %1727 = vmatpush1.bf16.msra.mxu0 0
        %1728 = vmatprep.subr.bf16.mxu0 0
        %1729 = vmatpush1.bf16.msra.mxu0 0
        %1730 = vmatprep.subr.bf16.mxu0 0
        %1731 = vmatpush1.bf16.msra.mxu0 0
        %1732 = vmatprep.subr.bf16.mxu0 0
        %1733 = vmatpush1.bf16.msra.mxu0 0
        %1734 = vmatprep.subr.bf16.mxu0 0
        %1735 = vmatpush1.bf16.msra.mxu0 0
        %1736 = vmatprep.subr.bf16.mxu0 0
        %1737 = vmatpush1.bf16.msra.mxu0 0
        %1738 = vmatprep.subr.bf16.mxu0 0
        %1739 = vmatpush1.bf16.msra.mxu0 0
        %1740 = vmatprep.subr.bf16.mxu0 0
        %1741 = vmatpush1.bf16.msra.mxu0 0
        %1742 = vmatprep.subr.bf16.mxu0 0
        %1743 = vmatpush1.bf16.msra.mxu0 0
        %1744 = vmatprep.subr.bf16.mxu0 0
        %1745 = vmatpush1.bf16.msra.mxu0 0
        %1746 = vmatprep.mubr.bf16.mxu0 0
        %1747 = vmatmul.mubr.bf16.gmra.mrb[0].mxu0 %v1709
        %v1748 = vpop.f32.mrb[0].mxu0
        %v1749 = vadd.f32 0.0, %v1748
        %v1750 = vpop.f32.mrb[0].mxu0
        %v1751 = vpop.f32.mrb[0].mxu0
        %v1752 = vpop.f32.mrb[0].mxu0
        %1753 = vdwg.mxu0
        %1754 = vrot.lane.b32.xlu0 %v478, 64
        %v1755 = vpop.permute.xlu0 %1754
        %v1757 = vsel %vm491, %v1455, 0
        %v1760 = vsel %vm1470, %v1755, 0
        %1762 = vmatprep.subr.bf16.mxu0 0
        %1763 = vmatpush1.bf16.msra.mxu0 %v1760
        %1764 = vmatprep.subr.bf16.mxu0 0
        %1765 = vmatpush1.bf16.msra.mxu0 0
        %1766 = vmatprep.subr.bf16.mxu0 0
        %1767 = vmatpush1.bf16.msra.mxu0 0
        %1768 = vmatprep.subr.bf16.mxu0 0
        %1769 = vmatpush1.bf16.msra.mxu0 0
        %1770 = vmatprep.subr.bf16.mxu0 0
        %1771 = vmatpush1.bf16.msra.mxu0 0
        %1772 = vmatprep.subr.bf16.mxu0 0
        %1773 = vmatpush1.bf16.msra.mxu0 0
        %1774 = vmatprep.subr.bf16.mxu0 0
        %1775 = vmatpush1.bf16.msra.mxu0 0
        %1776 = vmatprep.subr.bf16.mxu0 0
        %1777 = vmatpush1.bf16.msra.mxu0 0
        %1778 = vmatprep.subr.bf16.mxu0 0
        %1779 = vmatpush1.bf16.msra.mxu0 0
        %1780 = vmatprep.subr.bf16.mxu0 0
        %1781 = vmatpush1.bf16.msra.mxu0 0
        %1782 = vmatprep.subr.bf16.mxu0 0
        %1783 = vmatpush1.bf16.msra.mxu0 0
        %1784 = vmatprep.subr.bf16.mxu0 0
        %1785 = vmatpush1.bf16.msra.mxu0 0
        %1786 = vmatprep.subr.bf16.mxu0 0
        %1787 = vmatpush1.bf16.msra.mxu0 0
        %1788 = vmatprep.subr.bf16.mxu0 0
        %1789 = vmatpush1.bf16.msra.mxu0 0
        %1790 = vmatprep.subr.bf16.mxu0 0
        %1791 = vmatpush1.bf16.msra.mxu0 0
        %1792 = vmatprep.subr.bf16.mxu0 0
        %1793 = vmatpush1.bf16.msra.mxu0 0
        %1794 = vmatprep.mubr.bf16.mxu0 0
        %1795 = vmatmul.mubr.bf16.gmra.mrb[0].mxu0 %v1757
        %v1796 = vpop.f32.mrb[0].mxu0
        %v1797 = vadd.f32 0.0, %v1796
        %v1798 = vpop.f32.mrb[0].mxu0
        %v1799 = vpop.f32.mrb[0].mxu0
        %v1800 = vpop.f32.mrb[0].mxu0
        %1801 = vdwg.mxu0
        %1802 = vrot.lane.b32.xlu0 %v479, 64
        %v1803 = vpop.permute.xlu0 %1802
        %v1805 = vsel %vm491, %v1456, 0
        %v1808 = vsel %vm1470, %v1803, 0
        %1810 = vmatprep.subr.bf16.mxu0 0
        %1811 = vmatpush1.bf16.msra.mxu0 %v1808
        %1812 = vmatprep.subr.bf16.mxu0 0
        %1813 = vmatpush1.bf16.msra.mxu0 0
        %1814 = vmatprep.subr.bf16.mxu0 0
        %1815 = vmatpush1.bf16.msra.mxu0 0
        %1816 = vmatprep.subr.bf16.mxu0 0
        %1817 = vmatpush1.bf16.msra.mxu0 0
        %1818 = vmatprep.subr.bf16.mxu0 0
        %1819 = vmatpush1.bf16.msra.mxu0 0
        %1820 = vmatprep.subr.bf16.mxu0 0
        %1821 = vmatpush1.bf16.msra.mxu0 0
        %1822 = vmatprep.subr.bf16.mxu0 0
        %1823 = vmatpush1.bf16.msra.mxu0 0
        %1824 = vmatprep.subr.bf16.mxu0 0
        %1825 = vmatpush1.bf16.msra.mxu0 0
        %1826 = vmatprep.subr.bf16.mxu0 0
        %1827 = vmatpush1.bf16.msra.mxu0 0
        %1828 = vmatprep.subr.bf16.mxu0 0
        %1829 = vmatpush1.bf16.msra.mxu0 0
        %1830 = vmatprep.subr.bf16.mxu0 0
        %1831 = vmatpush1.bf16.msra.mxu0 0
        %1832 = vmatprep.subr.bf16.mxu0 0
        %1833 = vmatpush1.bf16.msra.mxu0 0
        %1834 = vmatprep.subr.bf16.mxu0 0
        %1835 = vmatpush1.bf16.msra.mxu0 0
        %1836 = vmatprep.subr.bf16.mxu0 0
        %1837 = vmatpush1.bf16.msra.mxu0 0
        %1838 = vmatprep.subr.bf16.mxu0 0
        %1839 = vmatpush1.bf16.msra.mxu0 0
        %1840 = vmatprep.subr.bf16.mxu0 0
        %1841 = vmatpush1.bf16.msra.mxu0 0
        %1842 = vmatprep.mubr.bf16.mxu0 0
        %1843 = vmatmul.mubr.bf16.gmra.mrb[0].mxu0 %v1805
        %v1844 = vpop.f32.mrb[0].mxu0
        %v1845 = vadd.f32 0.0, %v1844
        %v1846 = vpop.f32.mrb[0].mxu0
        %v1847 = vpop.f32.mrb[0].mxu0
        %v1848 = vpop.f32.mrb[0].mxu0
        %1849 = vdwg.mxu0
        %1850 = vrot.lane.b32.xlu0 %v480, 64
        %v1851 = vpop.permute.xlu0 %1850
        %v1853 = vsel %vm491, %v1457, 0
        %v1856 = vsel %vm1470, %v1851, 0
        %1858 = vmatprep.subr.bf16.mxu0 0
        %1859 = vmatpush1.bf16.msra.mxu0 %v1856
        %1860 = vmatprep.subr.bf16.mxu0 0
        %1861 = vmatpush1.bf16.msra.mxu0 0
        %1862 = vmatprep.subr.bf16.mxu0 0
        %1863 = vmatpush1.bf16.msra.mxu0 0
        %1864 = vmatprep.subr.bf16.mxu0 0
        %1865 = vmatpush1.bf16.msra.mxu0 0
        %1866 = vmatprep.subr.bf16.mxu0 0
        %1867 = vmatpush1.bf16.msra.mxu0 0
        %1868 = vmatprep.subr.bf16.mxu0 0
        %1869 = vmatpush1.bf16.msra.mxu0 0
        %1870 = vmatprep.subr.bf16.mxu0 0
        %1871 = vmatpush1.bf16.msra.mxu0 0
        %1872 = vmatprep.subr.bf16.mxu0 0
        %1873 = vmatpush1.bf16.msra.mxu0 0
        %1874 = vmatprep.subr.bf16.mxu0 0
        %1875 = vmatpush1.bf16.msra.mxu0 0
        %1876 = vmatprep.subr.bf16.mxu0 0
        %1877 = vmatpush1.bf16.msra.mxu0 0
        %1878 = vmatprep.subr.bf16.mxu0 0
        %1879 = vmatpush1.bf16.msra.mxu0 0
        %1880 = vmatprep.subr.bf16.mxu0 0
        %1881 = vmatpush1.bf16.msra.mxu0 0
        %1882 = vmatprep.subr.bf16.mxu0 0
        %1883 = vmatpush1.bf16.msra.mxu0 0
        %1884 = vmatprep.subr.bf16.mxu0 0
        %1885 = vmatpush1.bf16.msra.mxu0 0
        %1886 = vmatprep.subr.bf16.mxu0 0
        %1887 = vmatpush1.bf16.msra.mxu0 0
        %1888 = vmatprep.subr.bf16.mxu0 0
        %1889 = vmatpush1.bf16.msra.mxu0 0
        %1890 = vmatprep.mubr.bf16.mxu0 0
        %1891 = vmatmul.mubr.bf16.gmra.mrb[0].mxu0 %v1853
        %v1892 = vpop.f32.mrb[0].mxu0
        %v1893 = vadd.f32 0.0, %v1892
        %v1894 = vpop.f32.mrb[0].mxu0
        %v1895 = vpop.f32.mrb[0].mxu0
        %v1896 = vpop.f32.mrb[0].mxu0
        %1897 = vdwg.mxu0
        %1898 = vrot.lane.b32.xlu0 %v481, 64
        %v1899 = vpop.permute.xlu0 %1898
        %v1901 = vsel %vm491, %v1458, 0
        %v1904 = vsel %vm1470, %v1899, 0
        %1906 = vmatprep.subr.bf16.mxu0 0
        %1907 = vmatpush1.bf16.msra.mxu0 %v1904
        %1908 = vmatprep.subr.bf16.mxu0 0
        %1909 = vmatpush1.bf16.msra.mxu0 0
        %1910 = vmatprep.subr.bf16.mxu0 0
        %1911 = vmatpush1.bf16.msra.mxu0 0
        %1912 = vmatprep.subr.bf16.mxu0 0
        %1913 = vmatpush1.bf16.msra.mxu0 0
        %1914 = vmatprep.subr.bf16.mxu0 0
        %1915 = vmatpush1.bf16.msra.mxu0 0
        %1916 = vmatprep.subr.bf16.mxu0 0
        %1917 = vmatpush1.bf16.msra.mxu0 0
        %1918 = vmatprep.subr.bf16.mxu0 0
        %1919 = vmatpush1.bf16.msra.mxu0 0
        %1920 = vmatprep.subr.bf16.mxu0 0
        %1921 = vmatpush1.bf16.msra.mxu0 0
        %1922 = vmatprep.subr.bf16.mxu0 0
        %1923 = vmatpush1.bf16.msra.mxu0 0
        %1924 = vmatprep.subr.bf16.mxu0 0
        %1925 = vmatpush1.bf16.msra.mxu0 0
        %1926 = vmatprep.subr.bf16.mxu0 0
        %1927 = vmatpush1.bf16.msra.mxu0 0
        %1928 = vmatprep.subr.bf16.mxu0 0
        %1929 = vmatpush1.bf16.msra.mxu0 0
        %1930 = vmatprep.subr.bf16.mxu0 0
        %1931 = vmatpush1.bf16.msra.mxu0 0
        %1932 = vmatprep.subr.bf16.mxu0 0
        %1933 = vmatpush1.bf16.msra.mxu0 0
        %1934 = vmatprep.subr.bf16.mxu0 0
        %1935 = vmatpush1.bf16.msra.mxu0 0
        %1936 = vmatprep.subr.bf16.mxu0 0
        %1937 = vmatpush1.bf16.msra.mxu0 0
        %1938 = vmatprep.mubr.bf16.mxu0 0
        %1939 = vmatmul.mubr.bf16.gmra.mrb[0].mxu0 %v1901
        %v1940 = vpop.f32.mrb[0].mxu0
        %v1941 = vadd.f32 0.0, %v1940
        %v1942 = vpop.f32.mrb[0].mxu0
        %v1943 = vpop.f32.mrb[0].mxu0
        %v1944 = vpop.f32.mrb[0].mxu0
        %1945 = vdwg.mxu0
        %1946 = vrot.lane.b32.xlu0 %v482, 64
        %v1947 = vpop.permute.xlu0 %1946
        %v1949 = vsel %vm491, %v1459, 0
        %v1952 = vsel %vm1470, %v1947, 0
        %1954 = vmatprep.subr.bf16.mxu0 0
        %1955 = vmatpush1.bf16.msra.mxu0 %v1952
        %1956 = vmatprep.subr.bf16.mxu0 0
        %1957 = vmatpush1.bf16.msra.mxu0 0
        %1958 = vmatprep.subr.bf16.mxu0 0
        %1959 = vmatpush1.bf16.msra.mxu0 0
        %1960 = vmatprep.subr.bf16.mxu0 0
        %1961 = vmatpush1.bf16.msra.mxu0 0
        %1962 = vmatprep.subr.bf16.mxu0 0
        %1963 = vmatpush1.bf16.msra.mxu0 0
        %1964 = vmatprep.subr.bf16.mxu0 0
        %1965 = vmatpush1.bf16.msra.mxu0 0
        %1966 = vmatprep.subr.bf16.mxu0 0
        %1967 = vmatpush1.bf16.msra.mxu0 0
        %1968 = vmatprep.subr.bf16.mxu0 0
        %1969 = vmatpush1.bf16.msra.mxu0 0
        %1970 = vmatprep.subr.bf16.mxu0 0
        %1971 = vmatpush1.bf16.msra.mxu0 0
        %1972 = vmatprep.subr.bf16.mxu0 0
        %1973 = vmatpush1.bf16.msra.mxu0 0
        %1974 = vmatprep.subr.bf16.mxu0 0
        %1975 = vmatpush1.bf16.msra.mxu0 0
        %1976 = vmatprep.subr.bf16.mxu0 0
        %1977 = vmatpush1.bf16.msra.mxu0 0
        %1978 = vmatprep.subr.bf16.mxu0 0
        %1979 = vmatpush1.bf16.msra.mxu0 0
        %1980 = vmatprep.subr.bf16.mxu0 0
        %1981 = vmatpush1.bf16.msra.mxu0 0
        %1982 = vmatprep.subr.bf16.mxu0 0
        %1983 = vmatpush1.bf16.msra.mxu0 0
        %1984 = vmatprep.subr.bf16.mxu0 0
        %1985 = vmatpush1.bf16.msra.mxu0 0
        %1986 = vmatprep.mubr.bf16.mxu0 0
        %1987 = vmatmul.mubr.bf16.gmra.mrb[0].mxu0 %v1949
        %v1988 = vpop.f32.mrb[0].mxu0
        %v1989 = vadd.f32 0.0, %v1988
        %v1990 = vpop.f32.mrb[0].mxu0
        %v1991 = vpop.f32.mrb[0].mxu0
        %v1992 = vpop.f32.mrb[0].mxu0
        %1993 = vdwg.mxu0
        %1994 = vrot.lane.b32.xlu0 %v483, 64
        %v1995 = vpop.permute.xlu0 %1994
        %v1997 = vsel %vm491, %v1460, 0
        %v2000 = vsel %vm1470, %v1995, 0
        %2002 = vmatprep.subr.bf16.mxu0 0
        %2003 = vmatpush1.bf16.msra.mxu0 %v2000
        %2004 = vmatprep.subr.bf16.mxu0 0
        %2005 = vmatpush1.bf16.msra.mxu0 0
        %2006 = vmatprep.subr.bf16.mxu0 0
        %2007 = vmatpush1.bf16.msra.mxu0 0
        %2008 = vmatprep.subr.bf16.mxu0 0
        %2009 = vmatpush1.bf16.msra.mxu0 0
        %2010 = vmatprep.subr.bf16.mxu0 0
        %2011 = vmatpush1.bf16.msra.mxu0 0
        %2012 = vmatprep.subr.bf16.mxu0 0
        %2013 = vmatpush1.bf16.msra.mxu0 0
        %2014 = vmatprep.subr.bf16.mxu0 0
        %2015 = vmatpush1.bf16.msra.mxu0 0
        %2016 = vmatprep.subr.bf16.mxu0 0
        %2017 = vmatpush1.bf16.msra.mxu0 0
        %2018 = vmatprep.subr.bf16.mxu0 0
        %2019 = vmatpush1.bf16.msra.mxu0 0
        %2020 = vmatprep.subr.bf16.mxu0 0
        %2021 = vmatpush1.bf16.msra.mxu0 0
        %2022 = vmatprep.subr.bf16.mxu0 0
        %2023 = vmatpush1.bf16.msra.mxu0 0
        %2024 = vmatprep.subr.bf16.mxu0 0
        %2025 = vmatpush1.bf16.msra.mxu0 0
        %2026 = vmatprep.subr.bf16.mxu0 0
        %2027 = vmatpush1.bf16.msra.mxu0 0
        %2028 = vmatprep.subr.bf16.mxu0 0
        %2029 = vmatpush1.bf16.msra.mxu0 0
        %2030 = vmatprep.subr.bf16.mxu0 0
        %2031 = vmatpush1.bf16.msra.mxu0 0
        %2032 = vmatprep.subr.bf16.mxu0 0
        %2033 = vmatpush1.bf16.msra.mxu0 0
        %2034 = vmatprep.mubr.bf16.mxu0 0
        %2035 = vmatmul.mubr.bf16.gmra.mrb[0].mxu0 %v1997
        %v2036 = vpop.f32.mrb[0].mxu0
        %v2037 = vadd.f32 0.0, %v2036
        %v2038 = vpop.f32.mrb[0].mxu0
        %v2039 = vpop.f32.mrb[0].mxu0
        %v2040 = vpop.f32.mrb[0].mxu0
        %2041 = vdwg.mxu0
        %2042 = vrot.lane.b32.xlu0 %v484, 64
        %v2043 = vpop.permute.xlu0 %2042
        %v2045 = vsel %vm491, %v1461, 0
        %v2048 = vsel %vm1470, %v2043, 0
        %2050 = vmatprep.subr.bf16.mxu0 0
        %2051 = vmatpush1.bf16.msra.mxu0 %v2048
        %2052 = vmatprep.subr.bf16.mxu0 0
        %2053 = vmatpush1.bf16.msra.mxu0 0
        %2054 = vmatprep.subr.bf16.mxu0 0
        %2055 = vmatpush1.bf16.msra.mxu0 0
        %2056 = vmatprep.subr.bf16.mxu0 0
        %2057 = vmatpush1.bf16.msra.mxu0 0
        %2058 = vmatprep.subr.bf16.mxu0 0
        %2059 = vmatpush1.bf16.msra.mxu0 0
        %2060 = vmatprep.subr.bf16.mxu0 0
        %2061 = vmatpush1.bf16.msra.mxu0 0
        %2062 = vmatprep.subr.bf16.mxu0 0
        %2063 = vmatpush1.bf16.msra.mxu0 0
        %2064 = vmatprep.subr.bf16.mxu0 0
        %2065 = vmatpush1.bf16.msra.mxu0 0
        %2066 = vmatprep.subr.bf16.mxu0 0
        %2067 = vmatpush1.bf16.msra.mxu0 0
        %2068 = vmatprep.subr.bf16.mxu0 0
        %2069 = vmatpush1.bf16.msra.mxu0 0
        %2070 = vmatprep.subr.bf16.mxu0 0
        %2071 = vmatpush1.bf16.msra.mxu0 0
        %2072 = vmatprep.subr.bf16.mxu0 0
        %2073 = vmatpush1.bf16.msra.mxu0 0
        %2074 = vmatprep.subr.bf16.mxu0 0
        %2075 = vmatpush1.bf16.msra.mxu0 0
        %2076 = vmatprep.subr.bf16.mxu0 0
        %2077 = vmatpush1.bf16.msra.mxu0 0
        %2078 = vmatprep.subr.bf16.mxu0 0
        %2079 = vmatpush1.bf16.msra.mxu0 0
        %2080 = vmatprep.subr.bf16.mxu0 0
        %2081 = vmatpush1.bf16.msra.mxu0 0
        %2082 = vmatprep.mubr.bf16.mxu0 0
        %2083 = vmatmul.mubr.bf16.gmra.mrb[0].mxu0 %v2045
        %v2084 = vpop.f32.mrb[0].mxu0
        %v2085 = vadd.f32 0.0, %v2084
        %v2086 = vpop.f32.mrb[0].mxu0
        %v2087 = vpop.f32.mrb[0].mxu0
        %v2088 = vpop.f32.mrb[0].mxu0
        %2089 = vdwg.mxu0
        %2090 = vrot.lane.b32.xlu0 %v485, 64
        %v2091 = vpop.permute.xlu0 %2090
        %v2093 = vsel %vm491, %v1462, 0
        %v2096 = vsel %vm1470, %v2091, 0
        %2098 = vmatprep.subr.bf16.mxu0 0
        %2099 = vmatpush1.bf16.msra.mxu0 %v2096
        %2100 = vmatprep.subr.bf16.mxu0 0
        %2101 = vmatpush1.bf16.msra.mxu0 0
        %2102 = vmatprep.subr.bf16.mxu0 0
        %2103 = vmatpush1.bf16.msra.mxu0 0
        %2104 = vmatprep.subr.bf16.mxu0 0
        %2105 = vmatpush1.bf16.msra.mxu0 0
        %2106 = vmatprep.subr.bf16.mxu0 0
        %2107 = vmatpush1.bf16.msra.mxu0 0
        %2108 = vmatprep.subr.bf16.mxu0 0
        %2109 = vmatpush1.bf16.msra.mxu0 0
        %2110 = vmatprep.subr.bf16.mxu0 0
        %2111 = vmatpush1.bf16.msra.mxu0 0
        %2112 = vmatprep.subr.bf16.mxu0 0
        %2113 = vmatpush1.bf16.msra.mxu0 0
        %2114 = vmatprep.subr.bf16.mxu0 0
        %2115 = vmatpush1.bf16.msra.mxu0 0
        %2116 = vmatprep.subr.bf16.mxu0 0
        %2117 = vmatpush1.bf16.msra.mxu0 0
        %2118 = vmatprep.subr.bf16.mxu0 0
        %2119 = vmatpush1.bf16.msra.mxu0 0
        %2120 = vmatprep.subr.bf16.mxu0 0
        %2121 = vmatpush1.bf16.msra.mxu0 0
        %2122 = vmatprep.subr.bf16.mxu0 0
        %2123 = vmatpush1.bf16.msra.mxu0 0
        %2124 = vmatprep.subr.bf16.mxu0 0
        %2125 = vmatpush1.bf16.msra.mxu0 0
        %2126 = vmatprep.subr.bf16.mxu0 0
        %2127 = vmatpush1.bf16.msra.mxu0 0
        %2128 = vmatprep.subr.bf16.mxu0 0
        %2129 = vmatpush1.bf16.msra.mxu0 0
        %2130 = vmatprep.mubr.bf16.mxu0 0
        %2131 = vmatmul.mubr.bf16.gmra.mrb[0].mxu0 %v2093
        %v2132 = vpop.f32.mrb[0].mxu0
        %v2133 = vadd.f32 0.0, %v2132
        %v2134 = vpop.f32.mrb[0].mxu0
        %v2135 = vpop.f32.mrb[0].mxu0
        %v2136 = vpop.f32.mrb[0].mxu0
        %2137 = vdwg.mxu0
        %2138 = vrot.lane.b32.xlu0 %v486, 64
        %v2139 = vpop.permute.xlu0 %2138
        %v2141 = vsel %vm491, %v1463, 0
        %v2144 = vsel %vm1470, %v2139, 0
        %2146 = vmatprep.subr.bf16.mxu0 0
        %2147 = vmatpush1.bf16.msra.mxu0 %v2144
        %2148 = vmatprep.subr.bf16.mxu0 0
        %2149 = vmatpush1.bf16.msra.mxu0 0
        %2150 = vmatprep.subr.bf16.mxu0 0
        %2151 = vmatpush1.bf16.msra.mxu0 0
        %2152 = vmatprep.subr.bf16.mxu0 0
        %2153 = vmatpush1.bf16.msra.mxu0 0
        %2154 = vmatprep.subr.bf16.mxu0 0
        %2155 = vmatpush1.bf16.msra.mxu0 0
        %2156 = vmatprep.subr.bf16.mxu0 0
        %2157 = vmatpush1.bf16.msra.mxu0 0
        %2158 = vmatprep.subr.bf16.mxu0 0
        %2159 = vmatpush1.bf16.msra.mxu0 0
        %2160 = vmatprep.subr.bf16.mxu0 0
        %2161 = vmatpush1.bf16.msra.mxu0 0
        %2162 = vmatprep.subr.bf16.mxu0 0
        %2163 = vmatpush1.bf16.msra.mxu0 0
        %2164 = vmatprep.subr.bf16.mxu0 0
        %2165 = vmatpush1.bf16.msra.mxu0 0
        %2166 = vmatprep.subr.bf16.mxu0 0
        %2167 = vmatpush1.bf16.msra.mxu0 0
        %2168 = vmatprep.subr.bf16.mxu0 0
        %2169 = vmatpush1.bf16.msra.mxu0 0
        %2170 = vmatprep.subr.bf16.mxu0 0
        %2171 = vmatpush1.bf16.msra.mxu0 0
        %2172 = vmatprep.subr.bf16.mxu0 0
        %2173 = vmatpush1.bf16.msra.mxu0 0
        %2174 = vmatprep.subr.bf16.mxu0 0
        %2175 = vmatpush1.bf16.msra.mxu0 0
        %2176 = vmatprep.subr.bf16.mxu0 0
        %2177 = vmatpush1.bf16.msra.mxu0 0
        %2178 = vmatprep.mubr.bf16.mxu0 0
        %2179 = vmatmul.mubr.bf16.gmra.mrb[0].mxu0 %v2141
        %v2180 = vpop.f32.mrb[0].mxu0
        %v2181 = vadd.f32 0.0, %v2180
        %v2182 = vpop.f32.mrb[0].mxu0
        %v2183 = vpop.f32.mrb[0].mxu0
        %v2184 = vpop.f32.mrb[0].mxu0
        %2185 = vdwg.mxu0
        %2186 = vrot.lane.b32.xlu0 %v487, 64
        %v2187 = vpop.permute.xlu0 %2186
        %v2189 = vsel %vm491, %v1464, 0
        %v2192 = vsel %vm1470, %v2187, 0
        %2194 = vmatprep.subr.bf16.mxu0 0
        %2195 = vmatpush1.bf16.msra.mxu0 %v2192
        %2196 = vmatprep.subr.bf16.mxu0 0
        %2197 = vmatpush1.bf16.msra.mxu0 0
        %2198 = vmatprep.subr.bf16.mxu0 0
        %2199 = vmatpush1.bf16.msra.mxu0 0
        %2200 = vmatprep.subr.bf16.mxu0 0
        %2201 = vmatpush1.bf16.msra.mxu0 0
        %2202 = vmatprep.subr.bf16.mxu0 0
        %2203 = vmatpush1.bf16.msra.mxu0 0
        %2204 = vmatprep.subr.bf16.mxu0 0
        %2205 = vmatpush1.bf16.msra.mxu0 0
        %2206 = vmatprep.subr.bf16.mxu0 0
        %2207 = vmatpush1.bf16.msra.mxu0 0
        %2208 = vmatprep.subr.bf16.mxu0 0
        %2209 = vmatpush1.bf16.msra.mxu0 0
        %2210 = vmatprep.subr.bf16.mxu0 0
        %2211 = vmatpush1.bf16.msra.mxu0 0
        %2212 = vmatprep.subr.bf16.mxu0 0
        %2213 = vmatpush1.bf16.msra.mxu0 0
        %2214 = vmatprep.subr.bf16.mxu0 0
        %2215 = vmatpush1.bf16.msra.mxu0 0
        %2216 = vmatprep.subr.bf16.mxu0 0
        %2217 = vmatpush1.bf16.msra.mxu0 0
        %2218 = vmatprep.subr.bf16.mxu0 0
        %2219 = vmatpush1.bf16.msra.mxu0 0
        %2220 = vmatprep.subr.bf16.mxu0 0
        %2221 = vmatpush1.bf16.msra.mxu0 0
        %2222 = vmatprep.subr.bf16.mxu0 0
        %2223 = vmatpush1.bf16.msra.mxu0 0
        %2224 = vmatprep.subr.bf16.mxu0 0
        %2225 = vmatpush1.bf16.msra.mxu0 0
        %2226 = vmatprep.mubr.bf16.mxu0 0
        %2227 = vmatmul.mubr.bf16.gmra.mrb[0].mxu0 %v2189
        %v2228 = vpop.f32.mrb[0].mxu0
        %v2229 = vadd.f32 0.0, %v2228
        %v2230 = vpop.f32.mrb[0].mxu0
        %v2231 = vpop.f32.mrb[0].mxu0
        %v2232 = vpop.f32.mrb[0].mxu0
        %2233 = vdwg.mxu0
        %2238 = vrot.lane.b32.xlu0 %v1426, 8
        %v2239 = vpop.permute.xlu0 %2238
        %2240 = vrot.lane.b32.xlu0 %v1428, 8
        %v2241 = vpop.permute.xlu0 %2240
        %2242 = vrot.lane.b32.xlu0 %v1430, 8
        %v2243 = vpop.permute.xlu0 %2242
        %2244 = vrot.lane.b32.xlu0 %v1432, 8
        %v2245 = vpop.permute.xlu0 %2244
        %2254 = vrot.lane.b32.xlu0 %v1434, 16
        %v2255 = vpop.permute.xlu0 %2254
        %2256 = vrot.lane.b32.xlu0 %v1436, 16
        %v2257 = vpop.permute.xlu0 %2256
        %2258 = vrot.lane.b32.xlu0 %v1438, 16
        %v2259 = vpop.permute.xlu0 %2258
        %2260 = vrot.lane.b32.xlu0 %v1440, 16
        %v2261 = vpop.permute.xlu0 %2260
        %2270 = vrot.lane.b32.xlu0 %v1442, 24
        %v2271 = vpop.permute.xlu0 %2270
        %2272 = vrot.lane.b32.xlu0 %v1444, 24
        %v2273 = vpop.permute.xlu0 %2272
        %2274 = vrot.lane.b32.xlu0 %v1446, 24
        %v2275 = vpop.permute.xlu0 %2274
        %2276 = vrot.lane.b32.xlu0 %v1448, 24
        %v2277 = vpop.permute.xlu0 %2276
        %v2282 = vsel %vm491, %v1418, %v2239
        %v2283 = vsel %vm491, %v1420, %v2241
        %v2284 = vsel %vm491, %v1422, %v2243
        %v2285 = vsel %vm491, %v1424, %v2245
        %vm2286 = vcmask 130048
        %v2287 = vsel %vm2286, %v2282, %v2255
        %v2288 = vsel %vm2286, %v2283, %v2257
        %v2289 = vsel %vm2286, %v2284, %v2259
        %v2290 = vsel %vm2286, %v2285, %v2261
        %vm2291 = vcmask 195584
        %v2292 = vsel %vm2291, %v2287, %v2271
        %v2293 = vsel %vm2291, %v2288, %v2273
        %v2294 = vsel %vm2291, %v2289, %v2275
        %v2295 = vsel %vm2291, %v2290, %v2277
        %2296 = vst.msk [vmem:[%s334] sm:$0xff] %vm376, %v2292
        %2297 = vst.msk [vmem:[%s334 + $0x8] sm:$0xff] %vm376, %v2293
        %2298 = vst.msk [vmem:[%s334 + $0x10] sm:$0xff] %vm376, %v2294
        %2299 = vst.msk [vmem:[%s334 + $0x18] sm:$0xff] %vm376, %v2295
        %2304 = vrot.lane.b32.xlu0 %v1701, 8
        %v2305 = vpop.permute.xlu0 %2304
        %2306 = vrot.lane.b32.xlu0 %v1749, 8
        %v2307 = vpop.permute.xlu0 %2306
        %2308 = vrot.lane.b32.xlu0 %v1797, 8
        %v2309 = vpop.permute.xlu0 %2308
        %2310 = vrot.lane.b32.xlu0 %v1845, 8
        %v2311 = vpop.permute.xlu0 %2310
        %2320 = vrot.lane.b32.xlu0 %v1893, 16
        %v2321 = vpop.permute.xlu0 %2320
        %2322 = vrot.lane.b32.xlu0 %v1941, 16
        %v2323 = vpop.permute.xlu0 %2322
        %2324 = vrot.lane.b32.xlu0 %v1989, 16
        %v2325 = vpop.permute.xlu0 %2324
        %2326 = vrot.lane.b32.xlu0 %v2037, 16
        %v2327 = vpop.permute.xlu0 %2326
        %2336 = vrot.lane.b32.xlu0 %v2085, 24
        %v2337 = vpop.permute.xlu0 %2336
        %2338 = vrot.lane.b32.xlu0 %v2133, 24
        %v2339 = vpop.permute.xlu0 %2338
        %2340 = vrot.lane.b32.xlu0 %v2181, 24
        %v2341 = vpop.permute.xlu0 %2340
        %2342 = vrot.lane.b32.xlu0 %v2229, 24
        %v2343 = vpop.permute.xlu0 %2342
        %v2348 = vsel %vm491, %v1509, %v2305
        %v2349 = vsel %vm491, %v1557, %v2307
        %v2350 = vsel %vm491, %v1605, %v2309
        %v2351 = vsel %vm491, %v1653, %v2311
        %v2352 = vsel %vm2286, %v2348, %v2321
        %v2353 = vsel %vm2286, %v2349, %v2323
        %v2354 = vsel %vm2286, %v2350, %v2325
        %v2355 = vsel %vm2286, %v2351, %v2327
        %v2356 = vsel %vm2291, %v2352, %v2337
        %v2357 = vsel %vm2291, %v2353, %v2339
        %v2358 = vsel %vm2291, %v2354, %v2341
        %v2359 = vsel %vm2291, %v2355, %v2343
        %v2360 = vpack.c.bf16 %v2357, %v2356
        %v2361 = vpack.c.bf16 %v2359, %v2358
        %v2362 = vld [vmem:[#allocation8] sm:$0xf]
        %v2363 = vld [vmem:[#allocation8 + $0x4] sm:$0xf]
        %v2364 = vld [vmem:[#allocation8 + $0x8] sm:$0xf]
        %v2365 = vld [vmem:[#allocation8 + $0xc] sm:$0xf]
        %v2366 = vld [vmem:[#allocation10] sm:$0x1]
        %v2368 = vlaneseq
        %v2369 = vshrl.u32 %v2368, 7
        %v2370 = vsub.s32 0, %v2369
        %v2371 = vrot.slane %v2366, %v2370
        %v2377 = vunpack.c.l.b16 %v2362
        %v2378 = vunpack.c.l.b16 %v2363
        %v2379 = vunpack.c.l.b16 %v2364
        %v2380 = vunpack.c.l.b16 %v2365
        %v2381 = vpack.c.b16 %v2378, %v2377
        %v2382 = vpack.c.b16 %v2380, %v2379
        %v2386 = vsel %vm376, %v2360, 0
        %v2389 = vsel %vm376, %v2361, 0
        %2391 = vmatprep.subr.bf16.mxu0 0
        %2392 = vmatpush1.bf16.msra.mxu0 %v2381
        %2393 = vmatprep.subr.bf16.mxu0 0
        %2394 = vmatpush1.bf16.msra.mxu0 %v2382
        %2395 = vmatprep.subr.bf16.mxu0 0
        %2396 = vmatpush1.bf16.msra.mxu0 0
        %2397 = vmatprep.subr.bf16.mxu0 0
        %2398 = vmatpush1.bf16.msra.mxu0 0
        %2399 = vmatprep.subr.bf16.mxu0 0
        %2400 = vmatpush1.bf16.msra.mxu0 0
        %2401 = vmatprep.subr.bf16.mxu0 0
        %2402 = vmatpush1.bf16.msra.mxu0 0
        %2403 = vmatprep.subr.bf16.mxu0 0
        %2404 = vmatpush1.bf16.msra.mxu0 0
        %2405 = vmatprep.subr.bf16.mxu0 0
        %2406 = vmatpush1.bf16.msra.mxu0 0
        %2407 = vmatprep.subr.bf16.mxu0 0
        %2408 = vmatpush1.bf16.msra.mxu0 0
        %2409 = vmatprep.subr.bf16.mxu0 0
        %2410 = vmatpush1.bf16.msra.mxu0 0
        %2411 = vmatprep.subr.bf16.mxu0 0
        %2412 = vmatpush1.bf16.msra.mxu0 0
        %2413 = vmatprep.subr.bf16.mxu0 0
        %2414 = vmatpush1.bf16.msra.mxu0 0
        %2415 = vmatprep.subr.bf16.mxu0 0
        %2416 = vmatpush1.bf16.msra.mxu0 0
        %2417 = vmatprep.subr.bf16.mxu0 0
        %2418 = vmatpush1.bf16.msra.mxu0 0
        %2419 = vmatprep.subr.bf16.mxu0 0
        %2420 = vmatpush1.bf16.msra.mxu0 0
        %2421 = vmatprep.subr.bf16.mxu0 0
        %2422 = vmatpush1.bf16.msra.mxu0 0
        %2423 = vmatprep.mubr.bf16.mxu0 0
        %2424 = vmatmul.mubr.bf16.gmra.mrb[0].mxu0 %v2386
        %v2425 = vpop.f32.mrb[0].mxu0
        %v2426 = vadd.f32 %v2371, %v2425
        %v2427 = vpop.f32.mrb[0].mxu0
        %v2428 = vpop.f32.mrb[0].mxu0
        %v2429 = vadd.f32 %v2371, %v2428
        %v2430 = vpop.f32.mrb[0].mxu0
        %2431 = vmatprep.mubr.bf16.mxu0 0
        %2432 = vmatmul.mubr.bf16.gmra.mrb[0].mxu0 %v2389
        %v2433 = vpop.f32.mrb[0].mxu0
        %v2434 = vadd.f32 %v2371, %v2433
        %v2435 = vpop.f32.mrb[0].mxu0
        %v2436 = vpop.f32.mrb[0].mxu0
        %v2437 = vadd.f32 %v2371, %v2436
        %v2438 = vpop.f32.mrb[0].mxu0
        %2439 = vdwg.mxu0
        %2440 = vst.msk [vmem:[%s327] sm:$0xff] %vm376, %v2426
        %2441 = vst.msk [vmem:[%s327 + $0x8] sm:$0xff] %vm376, %v2429
        %2442 = vst.msk [vmem:[%s327 + $0x10] sm:$0xff] %vm376, %v2434
        %2443 = vst.msk [vmem:[%s327 + $0x18] sm:$0xff] %vm376, %v2437
        %s2444 = sand.u32 %s147, 1
        %s2445 = scalar_lea.sflag [#allocation4], %s2444
        %s2446 = sand.u32 %s147, 1
        %s2447 = smul.addr %s2446, 32
        %s2448 = scalar_lea.vmem [#allocation11], %s2447
        %s2449 = sand.u32 %s173, 1
        %s2450 = scalar_lea.sflag [#allocation13], %s2449
        %s2451 = sand.u32 %s173, 1
        %s2452 = smul.addr %s2451, 32
        %s2453 = scalar_lea.vmem [#allocation12], %s2452
        // Predicated region
        $region61: #{tpu_custom_call.1} parent=39 // pred_check
          %p2454 = pneg %p157
        $region62: #{tpu_custom_call.1} parent=39 // pred_check_branch
          %2456 = sbr.rel (%p2454) target = $region64
        $region63: #{tpu_custom_call.1} parent=39 // pred_region
          %s2457 = smul.u32 4, %s29
          %s2459 = ssub.s32 512, 512
          %2460 = vsyncadd %s2445, %s2459
          %s2461 = smul.addr %s2457, 128
          %s2462 = scalar_lea.hbm %s5, %s2461
          %s2463 = sshll.u32 %s2448, 4
          %s2464 = int_to_ptr.vmem [resolvable:$true] %s2463
          %2469 = dma.vmem_to_hbm [thread:$0]  %s2464, 512, %s2462, %s2445, 128, 128, 8
        $region64: #{tpu_custom_call.1} parent=39 // pred_fallthru
          _
        // Predicated region
        $region65: #{tpu_custom_call.1} parent=39 // pred_check
          %p2470 = pneg %p183
        $region66: #{tpu_custom_call.1} parent=39 // pred_check_branch
          %2472 = sbr.rel (%p2470) target = $region68
        $region67: #{tpu_custom_call.1} parent=39 // pred_region
          %s2473 = smul.u32 4, %s29
          %s2475 = ssub.s32 512, 512
          %2476 = vsyncadd %s2450, %s2475
          %s2477 = smul.addr %s2473, 128
          %s2478 = scalar_lea.hbm %s6, %s2477
          %s2479 = sshll.u32 %s2453, 4
          %s2480 = int_to_ptr.vmem [resolvable:$true] %s2479
          %2485 = dma.vmem_to_hbm [thread:$0]  %s2480, 512, %s2478, %s2450, 128, 128, 8
        $region68: #{tpu_custom_call.1} parent=39 // pred_fallthru
          _
      $region40: #{tpu_custom_call.1} parent=5 // pred_fallthru
        _
      %p2486 = scmp.le.s32.totalorder 2, %s24
      // Predicated region
      $region69: #{tpu_custom_call.1} parent=5 // pred_check
        %p2487 = pneg %p2486
      $region70: #{tpu_custom_call.1} parent=5 // pred_check_branch
        %2489 = sbr.rel (%p2487) target = $region72
      $region71: #{tpu_custom_call.1} parent=5 // pred_region
        %s2490 = ssub.s32 %s24, 2
        // Predicated region
        $region73: #{tpu_custom_call.1} parent=71 // pred_check
          %p2491 = pneg %p163
        $region74: #{tpu_custom_call.1} parent=71 // pred_check_branch
          %2493 = sbr.rel (%p2491) target = $region76
        $region75: #{tpu_custom_call.1} parent=71 // pred_region
          %s2494 = sand.u32 %s148, 1
          %s2495 = scalar_lea.sflag [#allocation4], %s2494
          %s2496 = sand.u32 %s148, 1
          %s2497 = smul.addr %s2496, 32
          %s2498 = scalar_lea.vmem [#allocation11], %s2497
          %2499 = dma.done %s2495, 512
        $region76: #{tpu_custom_call.1} parent=71 // pred_fallthru
          _
        // Predicated region
        $region77: #{tpu_custom_call.1} parent=71 // pred_check
          %p2500 = pneg %p189
        $region78: #{tpu_custom_call.1} parent=71 // pred_check_branch
          %2502 = sbr.rel (%p2500) target = $region80
        $region79: #{tpu_custom_call.1} parent=71 // pred_region
          %s2503 = sand.u32 %s174, 1
          %s2504 = scalar_lea.sflag [#allocation13], %s2503
          %s2505 = sand.u32 %s174, 1
          %s2506 = smul.addr %s2505, 32
          %s2507 = scalar_lea.vmem [#allocation12], %s2506
          %2508 = dma.done %s2504, 512
        $region80: #{tpu_custom_call.1} parent=71 // pred_fallthru
          _
      $region72: #{tpu_custom_call.1} parent=5 // pred_fallthru
        _
    $region6: #{tpu_custom_call.1} parent=1 // loop_footer
      %s28 = sadd.s32 1, %s24
    $region7: #{tpu_custom_call.1} parent=1 // loop_footer_branch
      %23 = sbr.rel target = $region3
    $region8: #{tpu_custom_call.1} parent=1 // loop_exit
      _
    %2509 = vsyncpa [#allocation3], 1
    %s2510 = scalar_lea.sflag [#allocation3], 1
    %2511 = vsyncpa %s2510, 1
    %2512 = vsyncpa [#allocation6], 1
    %2513 = vsyncpa [#allocation9], 1
    %2514 = vsyncpa [#allocation4], 1
    %s2515 = scalar_lea.sflag [#allocation4], 1
    %2516 = vsyncpa %s2515, 1
    %2517 = vsyncpa [#allocation13], 1
    %s2518 = scalar_lea.sflag [#allocation13], 1
    %2519 = vsyncpa %s2518, 1

</llo_original>
